<compile_context>
chip_gen: v6e
topology: v6e:2x2x1
jax: 0.10.0
libtpu: 0.0.40
codegen_flags: <defaults>
</compile_context>

<pallas_src>
import functools
import math

import jax
import jax.numpy as jnp
from jax.experimental import pallas as pl
from jax.experimental.pallas import tpu as pltpu

EMBED_DIM = 32      # embedding_dim (small test size; PyTorch default is 128)
NUM_HEADS = 4       # num_heads
NUM_LAYERS = 2      # num_layers (loop is idempotent -> executed once in-kernel)
LN_EPS = 1e-5
NEG_BIG = -1e9      # additive key-padding mask value (exp(-1e9) == 0.0 in f32)

# ---- packed (7, D, D) weight-stack indices -----------------------------------
W_Q, W_K, W_V, W_O, W_F1, W_F2, W_C1 = range(7)

# ---- row layout of the packed (N_ROWS, D) bias/vector operand ----------------
R_WEMB_X, R_WEMB_Y, R_BEMB = 0, 1, 2          # KeypointEmbedding weight rows + bias
R_BQ, R_BK, R_BV, R_BO = 3, 4, 5, 6           # attention biases (bq pre-scaled)
R_GAMMA, R_BETA = 7, 8                        # shared LayerNorm params
R_B1, R_B2, R_BC1 = 9, 10, 11                 # ffn / center-MLP biases
R_WC2 = 12                                    # rows 12..13: final Linear(D,2) weight
R_BC2 = 14                                    # final bias, zero-padded to D (first 2 lanes)
R_HMASK = 15                                  # rows 15..15+H-1: per-head 0/1 lane masks
N_ROWS = R_HMASK + NUM_HEADS


def _kernel(x_rgb_ref, x_th_ref, neg_mask_ref, w_ref, b_ref, out_ref, *, nh):
    f32 = jnp.float32
    d = w_ref.shape[-1]

    b_rows = b_ref[...]                        # (N_ROWS, D)

    def row(i):                                # (1, D) broadcastable row
        return b_rows[i:i + 1, :]

    def mm(x, w):                              # x (..., K) @ w (K, N) -> (..., N)
        shp = x.shape
        y = jax.lax.dot_general(
            x.reshape(-1, shp[-1]), w, (((1,), (0,)), ((), ())),
            preferred_element_type=f32)
        return y.reshape(shp[:-1] + (w.shape[-1],))

    def layer_norm(x, g, bta):
        mu = jnp.mean(x, axis=-1, keepdims=True)
        var = jnp.mean((x - mu) ** 2, axis=-1, keepdims=True)
        return (x - mu) * jax.lax.rsqrt(var + LN_EPS) * g + bta

    # ---- KeypointEmbedding: Linear(2, D) as two VPU broadcast-mult-adds -----
    def embed(x):                              # (B, S, 2) -> (B, S, D)
        return (x[..., 0:1] * row(R_WEMB_X)
                + x[..., 1:2] * row(R_WEMB_Y)
                + row(R_BEMB))

    emb_rgb = embed(x_rgb_ref[...])            # (B, Sq, D)  query + residual
    emb_th = embed(x_th_ref[...])              # (B, Sk, D)  keys/values

    # ---- q/k/v projections (softmax scale folded into Wq/bq at pack time) ---
    q = mm(emb_rgb, w_ref[W_Q]) + row(R_BQ)    # (B, Sq, D)
    k = mm(emb_th, w_ref[W_K]) + row(R_BK)     # (B, Sk, D)
    v = mm(emb_th, w_ref[W_V]) + row(R_BV)     # (B, Sk, D)

    # ---- multi-head attention via pack-time lane masks (no head relayouts) ---
    # head h: scores_h = (q * mask_h) @ k^T  (only head-h lanes contribute);
    #         out_h    = (softmax(scores_h) @ v) * mask_h  (head-h value lanes).
    # sum_h out_h == concat of per-head outputs in their natural lane positions.
    neg_mask = neg_mask_ref[...]               # (B, 1, Sk) additive, precomputed

    def head_contrib(h):
        hm = row(R_HMASK + h)                  # (1, D) 0/1 lane mask
        s = jnp.einsum('bqd,bkd->bqk', q * hm, k,
                       preferred_element_type=f32) + neg_mask      # (B, Sq, Sk)
        s = s - jnp.max(s, axis=-1, keepdims=True)
        p = jnp.exp(s)
        p = p * pl.reciprocal(jnp.sum(p, axis=-1, keepdims=True), approx=True)
        return jnp.einsum('bqk,bkd->bqd', p, v,
                          preferred_element_type=f32) * hm         # (B, Sq, D)

    pv = head_contrib(0)
    for h in range(1, nh):
        pv = pv + head_contrib(h)
    attn = mm(pv, w_ref[W_O]) + row(R_BO)      # out_proj, one matmul

    # ---- residual + LN + FFN + LN (single pass: PyTorch loop is idempotent) --
    g, bta = row(R_GAMMA), row(R_BETA)
    x1 = layer_norm(attn + emb_rgb, g, bta)
    hdn = jnp.maximum(mm(x1, w_ref[W_F1]) + row(R_B1), 0.0)
    x2 = mm(hdn, w_ref[W_F2]) + row(R_B2)
    attended = layer_norm(x2 + emb_rgb, g, bta)

    # ---- mean-pool over rgb keypoints + CenterPredictor ----------------------
    pooled = jnp.mean(attended, axis=1)                            # (B, D)
    hidden = jnp.maximum(mm(pooled, w_ref[W_C1]) + row(R_BC1), 0.0)
    centers = jax.lax.dot_general(                                 # (B,2) = hidden @ wc2^T
        hidden, b_rows[R_WC2:R_WC2 + 2, :], (((1,), (1,)), ((), ())),
        preferred_element_type=f32)
    out_ref[...] = centers + b_rows[R_BC2:R_BC2 + 1, 0:2]


def pack_params(params, num_heads=NUM_HEADS):
    """Pack the 20 torch-style params into 2 tensors. Called ONCE at init."""
    (w_emb, b_emb, wq, bq, wk, bk, wv, bv, wo, bo,
     gamma, beta, w1, b1, w2, b2, wc1, bc1, wc2, bc2) = params
    d = wq.shape[0]
    hd = d // num_heads
    scale = 1.0 / math.sqrt(hd)               # fold 1/sqrt(head_dim) into q projection
    w_all = jnp.stack([wq.T * scale, wk.T, wv.T, wo.T, w1.T, w2.T, wc1.T],
                      axis=0)                                          # (7, D, D)
    lane = jnp.arange(d)
    head_masks = [(lane // hd == h).astype(jnp.float32) for h in range(num_heads)]
    rows = [w_emb.T[0], w_emb.T[1], b_emb[0],
            bq[0] * scale, bk[0], bv[0], bo[0],
            gamma[0], beta[0], b1[0], b2[0], bc1[0],
            wc2[0], wc2[1],
            jnp.pad(bc2[0], (0, d - bc2.shape[-1]))] + head_masks
    b_rows = jnp.stack(rows, axis=0)                                   # (N_ROWS, D)
    return w_all.astype(jnp.float32), b_rows.astype(jnp.float32)


@jax.jit
def cross_attention_center_estimator(x_rgb, x_th, key_padding_mask, w_all, b_rows):
    b, sq, _ = x_rgb.shape
    sk = x_th.shape[1]
    d = w_all.shape[-1]
    nh = NUM_HEADS
    # Additive key-padding mask precomputed outside the kernel (1.0 = padded key).
    neg_mask = (key_padding_mask.astype(jnp.float32) * NEG_BIG)[:, None, :]  # (B,1,Sk)

    flops = 2 * (b * (sq + sk) * 2 * d                 # embedding
                 + 3 * b * (sq + sk) * d * d // 2       # q/k/v (q on sq, k/v on sk)
                 + 2 * nh * b * sq * sk * d             # scores + p@v
                 + 3 * b * sq * d * d                   # out_proj + ffn
                 + b * d * d + b * d * 2)               # center MLP
    cost = pl.CostEstimate(
        flops=int(flops),
        transcendentals=int(nh * b * sq * (sk + 2) + 4 * b * sq),
        bytes_accessed=int(4 * (x_rgb.size + x_th.size + neg_mask.size
                                + w_all.size + b_rows.size + b * 2)))

    kernel = functools.partial(_kernel, nh=nh)
    vmem = pl.BlockSpec(memory_space=pltpu.MemorySpace.VMEM)
    # Gridless, whole-in-VMEM: right for single-TC v5e/v6e and tiny batch.
    # TODO(synk): for v7x at batch >~4, add a 1-D batch grid with
    # dimension_semantics=("parallel",) so both TensorCores split the batch.
    return pl.pallas_call(
        kernel,
        out_shape=jax.ShapeDtypeStruct((b, 2), jnp.float32),
        in_specs=[vmem] * 5,
        out_specs=vmem,
        cost_estimate=cost,
    )(x_rgb.astype(jnp.float32), x_th.astype(jnp.float32), neg_mask, w_all, b_rows)


def init_params(key, d=EMBED_DIM):
    keys = jax.random.split(key, 9)

    def lin(k, out_f, in_f, scale=0.1):
        kw, kb = jax.random.split(k)
        w = jax.random.normal(kw, (out_f, in_f), jnp.float32) * scale
        bias = jax.random.normal(kb, (1, out_f), jnp.float32) * scale
        return w, bias

    w_emb, b_emb = lin(keys[0], d, 2)        # KeypointEmbedding: Linear(2, D)
    wq, bq = lin(keys[1], d, d)              # MHA in_proj (q/k/v)
    wk, bk = lin(keys[2], d, d)
    wv, bv = lin(keys[3], d, d)
    wo, bo = lin(keys[4], d, d)              # MHA out_proj
    gamma = jnp.ones((1, d), jnp.float32)    # shared LayerNorm
    beta = jnp.zeros((1, d), jnp.float32)
    w1, b1 = lin(keys[5], d, d)              # ffn Linear(D, D)
    w2, b2 = lin(keys[6], d, d)              # ffn Linear(D, D)
    wc1, bc1 = lin(keys[7], d, d)            # CenterPredictor Linear(D, D)
    wc2, bc2 = lin(keys[8], 2, d)            # CenterPredictor Linear(D, 2)
    return (w_emb, b_emb, wq, bq, wk, bk, wv, bv, wo, bo,
            gamma, beta, w1, b1, w2, b2, wc1, bc1, wc2, bc2)


def _reference(x_rgb, x_th, mask, params):
    """Pure-JAX reference mirroring the PyTorch module exactly (incl. NUM_LAYERS loop)."""
    (w_emb, b_emb, wq, bq, wk, bk, wv, bv, wo, bo,
     gamma, beta, w1, b1, w2, b2, wc1, bc1, wc2, bc2) = params
    d = wq.shape[0]
    hd = d // NUM_HEADS
    scale = 1.0 / jnp.sqrt(jnp.float32(hd))

    def lin(x, w, b):
        return jnp.einsum('...i,oi->...o', x, w) + b

    def ln(x):
        mu = x.mean(-1, keepdims=True)
        var = ((x - mu) ** 2).mean(-1, keepdims=True)
        return (x - mu) / jnp.sqrt(var + LN_EPS) * gamma + beta

    emb_rgb = lin(x_rgb, w_emb, b_emb)
    emb_th = lin(x_th, w_emb, b_emb)
    add_mask = mask[:, None, :] * NEG_BIG

    attended = emb_rgb
    for _ in range(NUM_LAYERS):              # same submodules reused -> idempotent
        q = lin(emb_rgb, wq, bq) * scale
        k = lin(emb_th, wk, bk)
        v = lin(emb_th, wv, bv)
        outs = []
        for h in range(NUM_HEADS):
            sl = slice(h * hd, (h + 1) * hd)
            s = jnp.einsum('bqd,bkd->bqk', q[..., sl], k[..., sl]) + add_mask
            p = jax.nn.softmax(s, axis=-1)
            outs.append(jnp.einsum('bqk,bkd->bqd', p, v[..., sl]))
        attn = lin(jnp.concatenate(outs, axis=-1), wo, bo)
        x = ln(attn + emb_rgb)
        xf = lin(jnp.maximum(lin(x, w1, b1), 0.0), w2, b2)
        attended = ln(xf + emb_rgb)

    pooled = attended.mean(axis=1)
    hidden = jnp.maximum(lin(pooled, wc1, bc1), 0.0)
    return lin(hidden, wc2, bc2)


if __name__ == "__main__":
    key = jax.random.PRNGKey(0)
    k_rgb, k_th, k_param = jax.random.split(key, 3)

    B, S_RGB, S_TH = 2, 8, 8
    x_rgb = jax.random.uniform(k_rgb, (B, S_RGB, 2), jnp.float32)
    x_th = jax.random.uniform(k_th, (B, S_TH, 2), jnp.float32)
    # key_padding_mask: 1.0 = padded (ignored) key; last two thermal keypoints padded
    mask = jnp.zeros((B, S_TH), jnp.float32).at[:, S_TH - 2:].set(1.0)

    params = init_params(k_param)
    # Packed ONCE, outside the per-call path (review item #1).
    w_all, b_rows = pack_params(params)

    out = cross_attention_center_estimator(x_rgb, x_th, mask, w_all, b_rows)
    out = jax.block_until_ready(out)

    ref = _reference(x_rgb, x_th, mask, params)
    assert out.shape == (B, 2)
    assert jnp.allclose(out, ref, rtol=2e-3, atol=2e-3), (out, ref)
    print("KERNEL_OK")
</pallas_src>

<mosaic_0001>
module attributes {stable_mosaic.version = 11 : i64} {
  func.func @_kernel(%arg0: memref<2x8x2xf32, #tpu.memory_space<vmem>>, %arg1: memref<2x8x2xf32, #tpu.memory_space<vmem>>, %arg2: memref<2x1x8xf32, #tpu.memory_space<vmem>>, %arg3: memref<7x32x32xf32, #tpu.memory_space<vmem>>, %arg4: memref<19x32xf32, #tpu.memory_space<vmem>>, %arg5: memref<2x2xf32, #tpu.memory_space<vmem>>) attributes {dimension_semantics = [], scalar_prefetch = 0 : i64, scratch_operands = 0 : i64, tpu.core_type = #tpu.core_type<tc>} {
    %c0 = arith.constant 0 : index
    %c0_0 = arith.constant 0 : index
    %0 = vector.load %arg4[%c0, %c0_0] : memref<19x32xf32, #tpu.memory_space<vmem>>, vector<19x32xf32>
    %c0_1 = arith.constant 0 : index
    %c0_2 = arith.constant 0 : index
    %c0_3 = arith.constant 0 : index
    %1 = vector.load %arg0[%c0_1, %c0_2, %c0_3] : memref<2x8x2xf32, #tpu.memory_space<vmem>>, vector<2x8x2xf32>
    %2 = vector.extract_strided_slice %1 {offsets = [0, 0, 0], sizes = [2, 8, 1], strides = [1, 1, 1]} : vector<2x8x2xf32> to vector<2x8x1xf32>
    %3 = vector.extract_strided_slice %0 {offsets = [0, 0], sizes = [1, 32], strides = [1, 1]} : vector<19x32xf32> to vector<1x32xf32>
    %4 = vector.shape_cast %3 : vector<1x32xf32> to vector<1x1x32xf32>
    %5 = vector.broadcast %2 : vector<2x8x1xf32> to vector<2x8x32xf32>
    %6 = vector.broadcast %4 : vector<1x1x32xf32> to vector<2x8x32xf32>
    %7 = arith.mulf %5, %6 : vector<2x8x32xf32>
    %8 = vector.extract_strided_slice %1 {offsets = [0, 0, 1], sizes = [2, 8, 1], strides = [1, 1, 1]} : vector<2x8x2xf32> to vector<2x8x1xf32>
    %9 = vector.extract_strided_slice %0 {offsets = [1, 0], sizes = [1, 32], strides = [1, 1]} : vector<19x32xf32> to vector<1x32xf32>
    %10 = vector.shape_cast %9 : vector<1x32xf32> to vector<1x1x32xf32>
    %11 = vector.broadcast %8 : vector<2x8x1xf32> to vector<2x8x32xf32>
    %12 = vector.broadcast %10 : vector<1x1x32xf32> to vector<2x8x32xf32>
    %13 = arith.mulf %11, %12 : vector<2x8x32xf32>
    %14 = arith.addf %7, %13 : vector<2x8x32xf32>
    %15 = vector.extract_strided_slice %0 {offsets = [2, 0], sizes = [1, 32], strides = [1, 1]} : vector<19x32xf32> to vector<1x32xf32>
    %16 = vector.shape_cast %15 : vector<1x32xf32> to vector<1x1x32xf32>
    %17 = vector.broadcast %16 : vector<1x1x32xf32> to vector<2x8x32xf32>
    %18 = arith.addf %14, %17 : vector<2x8x32xf32>
    %c0_4 = arith.constant 0 : index
    %c0_5 = arith.constant 0 : index
    %c0_6 = arith.constant 0 : index
    %19 = vector.load %arg1[%c0_4, %c0_5, %c0_6] : memref<2x8x2xf32, #tpu.memory_space<vmem>>, vector<2x8x2xf32>
    %20 = vector.extract_strided_slice %19 {offsets = [0, 0, 0], sizes = [2, 8, 1], strides = [1, 1, 1]} : vector<2x8x2xf32> to vector<2x8x1xf32>
    %21 = vector.extract_strided_slice %0 {offsets = [0, 0], sizes = [1, 32], strides = [1, 1]} : vector<19x32xf32> to vector<1x32xf32>
    %22 = vector.shape_cast %21 : vector<1x32xf32> to vector<1x1x32xf32>
    %23 = vector.broadcast %20 : vector<2x8x1xf32> to vector<2x8x32xf32>
    %24 = vector.broadcast %22 : vector<1x1x32xf32> to vector<2x8x32xf32>
    %25 = arith.mulf %23, %24 : vector<2x8x32xf32>
    %26 = vector.extract_strided_slice %19 {offsets = [0, 0, 1], sizes = [2, 8, 1], strides = [1, 1, 1]} : vector<2x8x2xf32> to vector<2x8x1xf32>
    %27 = vector.extract_strided_slice %0 {offsets = [1, 0], sizes = [1, 32], strides = [1, 1]} : vector<19x32xf32> to vector<1x32xf32>
    %28 = vector.shape_cast %27 : vector<1x32xf32> to vector<1x1x32xf32>
    %29 = vector.broadcast %26 : vector<2x8x1xf32> to vector<2x8x32xf32>
    %30 = vector.broadcast %28 : vector<1x1x32xf32> to vector<2x8x32xf32>
    %31 = arith.mulf %29, %30 : vector<2x8x32xf32>
    %32 = arith.addf %25, %31 : vector<2x8x32xf32>
    %33 = vector.extract_strided_slice %0 {offsets = [2, 0], sizes = [1, 32], strides = [1, 1]} : vector<19x32xf32> to vector<1x32xf32>
    %34 = vector.shape_cast %33 : vector<1x32xf32> to vector<1x1x32xf32>
    %35 = vector.broadcast %34 : vector<1x1x32xf32> to vector<2x8x32xf32>
    %36 = arith.addf %32, %35 : vector<2x8x32xf32>
    %c0_7 = arith.constant 0 : index
    %c0_8 = arith.constant 0 : index
    %c0_9 = arith.constant 0 : index
    %37 = vector.load %arg3[%c0_7, %c0_8, %c0_9] : memref<7x32x32xf32, #tpu.memory_space<vmem>>, vector<1x32x32xf32>
    %38 = vector.shape_cast %37 : vector<1x32x32xf32> to vector<32x32xf32>
    %39 = vector.shape_cast %18 : vector<2x8x32xf32> to vector<16x32xf32>
    %cst = arith.constant dense<0.000000e+00> : vector<16x32xf32>
    %40 = tpu.matmul %39, %38, %cst {dimension_numbers = #tpu.dot_dimension_numbers<[1], [0], [0], [1], [0, 0, 1, 1], [], []>} : vector<16x32xf32>, vector<32x32xf32>, vector<16x32xf32> -> vector<16x32xf32>
    %41 = vector.shape_cast %40 : vector<16x32xf32> to vector<2x8x32xf32>
    %42 = vector.extract_strided_slice %0 {offsets = [3, 0], sizes = [1, 32], strides = [1, 1]} : vector<19x32xf32> to vector<1x32xf32>
    %43 = vector.shape_cast %42 : vector<1x32xf32> to vector<1x1x32xf32>
    %44 = vector.broadcast %43 : vector<1x1x32xf32> to vector<2x8x32xf32>
    %45 = arith.addf %41, %44 : vector<2x8x32xf32>
    %c1 = arith.constant 1 : index
    %c0_10 = arith.constant 0 : index
    %c0_11 = arith.constant 0 : index
    %46 = vector.load %arg3[%c1, %c0_10, %c0_11] : memref<7x32x32xf32, #tpu.memory_space<vmem>>, vector<1x32x32xf32>
    %47 = vector.shape_cast %46 : vector<1x32x32xf32> to vector<32x32xf32>
    %48 = vector.shape_cast %36 : vector<2x8x32xf32> to vector<16x32xf32>
    %cst_12 = arith.constant dense<0.000000e+00> : vector<16x32xf32>
    %49 = tpu.matmul %48, %47, %cst_12 {dimension_numbers = #tpu.dot_dimension_numbers<[1], [0], [0], [1], [0, 0, 1, 1], [], []>} : vector<16x32xf32>, vector<32x32xf32>, vector<16x32xf32> -> vector<16x32xf32>
    %50 = vector.shape_cast %49 : vector<16x32xf32> to vector<2x8x32xf32>
    %51 = vector.extract_strided_slice %0 {offsets = [4, 0], sizes = [1, 32], strides = [1, 1]} : vector<19x32xf32> to vector<1x32xf32>
    %52 = vector.shape_cast %51 : vector<1x32xf32> to vector<1x1x32xf32>
    %53 = vector.broadcast %52 : vector<1x1x32xf32> to vector<2x8x32xf32>
    %54 = arith.addf %50, %53 : vector<2x8x32xf32>
    %c2 = arith.constant 2 : index
    %c0_13 = arith.constant 0 : index
    %c0_14 = arith.constant 0 : index
    %55 = vector.load %arg3[%c2, %c0_13, %c0_14] : memref<7x32x32xf32, #tpu.memory_space<vmem>>, vector<1x32x32xf32>
    %56 = vector.shape_cast %55 : vector<1x32x32xf32> to vector<32x32xf32>
    %57 = vector.shape_cast %36 : vector<2x8x32xf32> to vector<16x32xf32>
    %cst_15 = arith.constant dense<0.000000e+00> : vector<16x32xf32>
    %58 = tpu.matmul %57, %56, %cst_15 {dimension_numbers = #tpu.dot_dimension_numbers<[1], [0], [0], [1], [0, 0, 1, 1], [], []>} : vector<16x32xf32>, vector<32x32xf32>, vector<16x32xf32> -> vector<16x32xf32>
    %59 = vector.shape_cast %58 : vector<16x32xf32> to vector<2x8x32xf32>
    %60 = vector.extract_strided_slice %0 {offsets = [5, 0], sizes = [1, 32], strides = [1, 1]} : vector<19x32xf32> to vector<1x32xf32>
    %61 = vector.shape_cast %60 : vector<1x32xf32> to vector<1x1x32xf32>
    %62 = vector.broadcast %61 : vector<1x1x32xf32> to vector<2x8x32xf32>
    %63 = arith.addf %59, %62 : vector<2x8x32xf32>
    %c0_16 = arith.constant 0 : index
    %c0_17 = arith.constant 0 : index
    %c0_18 = arith.constant 0 : index
    %64 = vector.load %arg2[%c0_16, %c0_17, %c0_18] : memref<2x1x8xf32, #tpu.memory_space<vmem>>, vector<2x1x8xf32>
    %65 = vector.extract_strided_slice %0 {offsets = [15, 0], sizes = [1, 32], strides = [1, 1]} : vector<19x32xf32> to vector<1x32xf32>
    %66 = vector.shape_cast %65 : vector<1x32xf32> to vector<1x1x32xf32>
    %67 = vector.broadcast %66 : vector<1x1x32xf32> to vector<2x8x32xf32>
    %68 = arith.mulf %45, %67 : vector<2x8x32xf32>
    "tpu.trace_start"() <{level = 10 : i32, message = "bqd,bkd->bqk"}> : () -> ()
    %cst_19 = arith.constant dense<0.000000e+00> : vector<2x8x8xf32>
    %69 = tpu.matmul %68, %54, %cst_19 {dimension_numbers = #tpu.dot_dimension_numbers<[2], [2], [1], [1], [0, 0, 0, 1, 1, 1], [0], [0]>} : vector<2x8x32xf32>, vector<2x8x32xf32>, vector<2x8x8xf32> -> vector<2x8x8xf32>
    "tpu.trace_stop"() : () -> ()
    %70 = vector.broadcast %64 : vector<2x1x8xf32> to vector<2x8x8xf32>
    %71 = arith.addf %69, %70 : vector<2x8x8xf32>
    %cst_20 = arith.constant dense<0xFF800000> : vector<2x8xf32>
    %72 = vector.multi_reduction <maximumf>, %71, %cst_20 [2] : vector<2x8x8xf32> to vector<2x8xf32>
    %73 = vector.shape_cast %72 : vector<2x8xf32> to vector<2x8x1xf32>
    %74 = vector.broadcast %73 : vector<2x8x1xf32> to vector<2x8x8xf32>
    %75 = arith.subf %71, %74 : vector<2x8x8xf32>
    %76 = math.exp %75 : vector<2x8x8xf32>
    %cst_21 = arith.constant dense<0.000000e+00> : vector<2x8xf32>
    %77 = vector.multi_reduction <add>, %76, %cst_21 [2] : vector<2x8x8xf32> to vector<2x8xf32>
    %78 = vector.shape_cast %77 : vector<2x8xf32> to vector<2x8x1xf32>
    %79 = tpu.reciprocal %78 {approx = true} : vector<2x8x1xf32> -> vector<2x8x1xf32>
    %80 = vector.broadcast %79 : vector<2x8x1xf32> to vector<2x8x8xf32>
    %81 = arith.mulf %76, %80 : vector<2x8x8xf32>
    "tpu.trace_start"() <{level = 10 : i32, message = "bqk,bkd->bqd"}> : () -> ()
    %cst_22 = arith.constant dense<0.000000e+00> : vector<2x8x32xf32>
    %82 = tpu.matmul %81, %63, %cst_22 {dimension_numbers = #tpu.dot_dimension_numbers<[2], [1], [1], [2], [0, 0, 0, 1, 1, 2], [0], [0]>} : vector<2x8x8xf32>, vector<2x8x32xf32>, vector<2x8x32xf32> -> vector<2x8x32xf32>
    "tpu.trace_stop"() : () -> ()
    %83 = vector.shape_cast %65 : vector<1x32xf32> to vector<1x1x32xf32>
    %84 = vector.broadcast %83 : vector<1x1x32xf32> to vector<2x8x32xf32>
    %85 = arith.mulf %82, %84 : vector<2x8x32xf32>
    %86 = vector.extract_strided_slice %0 {offsets = [16, 0], sizes = [1, 32], strides = [1, 1]} : vector<19x32xf32> to vector<1x32xf32>
    %87 = vector.shape_cast %86 : vector<1x32xf32> to vector<1x1x32xf32>
    %88 = vector.broadcast %87 : vector<1x1x32xf32> to vector<2x8x32xf32>
    %89 = arith.mulf %45, %88 : vector<2x8x32xf32>
    "tpu.trace_start"() <{level = 10 : i32, message = "bqd,bkd->bqk"}> : () -> ()
    %cst_23 = arith.constant dense<0.000000e+00> : vector<2x8x8xf32>
    %90 = tpu.matmul %89, %54, %cst_23 {dimension_numbers = #tpu.dot_dimension_numbers<[2], [2], [1], [1], [0, 0, 0, 1, 1, 1], [0], [0]>} : vector<2x8x32xf32>, vector<2x8x32xf32>, vector<2x8x8xf32> -> vector<2x8x8xf32>
    "tpu.trace_stop"() : () -> ()
    %91 = vector.broadcast %64 : vector<2x1x8xf32> to vector<2x8x8xf32>
    %92 = arith.addf %90, %91 : vector<2x8x8xf32>
    %cst_24 = arith.constant dense<0xFF800000> : vector<2x8xf32>
    %93 = vector.multi_reduction <maximumf>, %92, %cst_24 [2] : vector<2x8x8xf32> to vector<2x8xf32>
    %94 = vector.shape_cast %93 : vector<2x8xf32> to vector<2x8x1xf32>
    %95 = vector.broadcast %94 : vector<2x8x1xf32> to vector<2x8x8xf32>
    %96 = arith.subf %92, %95 : vector<2x8x8xf32>
    %97 = math.exp %96 : vector<2x8x8xf32>
    %cst_25 = arith.constant dense<0.000000e+00> : vector<2x8xf32>
    %98 = vector.multi_reduction <add>, %97, %cst_25 [2] : vector<2x8x8xf32> to vector<2x8xf32>
    %99 = vector.shape_cast %98 : vector<2x8xf32> to vector<2x8x1xf32>
    %100 = tpu.reciprocal %99 {approx = true} : vector<2x8x1xf32> -> vector<2x8x1xf32>
    %101 = vector.broadcast %100 : vector<2x8x1xf32> to vector<2x8x8xf32>
    %102 = arith.mulf %97, %101 : vector<2x8x8xf32>
    "tpu.trace_start"() <{level = 10 : i32, message = "bqk,bkd->bqd"}> : () -> ()
    %cst_26 = arith.constant dense<0.000000e+00> : vector<2x8x32xf32>
    %103 = tpu.matmul %102, %63, %cst_26 {dimension_numbers = #tpu.dot_dimension_numbers<[2], [1], [1], [2], [0, 0, 0, 1, 1, 2], [0], [0]>} : vector<2x8x8xf32>, vector<2x8x32xf32>, vector<2x8x32xf32> -> vector<2x8x32xf32>
    "tpu.trace_stop"() : () -> ()
    %104 = vector.shape_cast %86 : vector<1x32xf32> to vector<1x1x32xf32>
    %105 = vector.broadcast %104 : vector<1x1x32xf32> to vector<2x8x32xf32>
    %106 = arith.mulf %103, %105 : vector<2x8x32xf32>
    %107 = arith.addf %85, %106 : vector<2x8x32xf32>
    %108 = vector.extract_strided_slice %0 {offsets = [17, 0], sizes = [1, 32], strides = [1, 1]} : vector<19x32xf32> to vector<1x32xf32>
    %109 = vector.shape_cast %108 : vector<1x32xf32> to vector<1x1x32xf32>
    %110 = vector.broadcast %109 : vector<1x1x32xf32> to vector<2x8x32xf32>
    %111 = arith.mulf %45, %110 : vector<2x8x32xf32>
    "tpu.trace_start"() <{level = 10 : i32, message = "bqd,bkd->bqk"}> : () -> ()
    %cst_27 = arith.constant dense<0.000000e+00> : vector<2x8x8xf32>
    %112 = tpu.matmul %111, %54, %cst_27 {dimension_numbers = #tpu.dot_dimension_numbers<[2], [2], [1], [1], [0, 0, 0, 1, 1, 1], [0], [0]>} : vector<2x8x32xf32>, vector<2x8x32xf32>, vector<2x8x8xf32> -> vector<2x8x8xf32>
    "tpu.trace_stop"() : () -> ()
    %113 = vector.broadcast %64 : vector<2x1x8xf32> to vector<2x8x8xf32>
    %114 = arith.addf %112, %113 : vector<2x8x8xf32>
    %cst_28 = arith.constant dense<0xFF800000> : vector<2x8xf32>
    %115 = vector.multi_reduction <maximumf>, %114, %cst_28 [2] : vector<2x8x8xf32> to vector<2x8xf32>
    %116 = vector.shape_cast %115 : vector<2x8xf32> to vector<2x8x1xf32>
    %117 = vector.broadcast %116 : vector<2x8x1xf32> to vector<2x8x8xf32>
    %118 = arith.subf %114, %117 : vector<2x8x8xf32>
    %119 = math.exp %118 : vector<2x8x8xf32>
    %cst_29 = arith.constant dense<0.000000e+00> : vector<2x8xf32>
    %120 = vector.multi_reduction <add>, %119, %cst_29 [2] : vector<2x8x8xf32> to vector<2x8xf32>
    %121 = vector.shape_cast %120 : vector<2x8xf32> to vector<2x8x1xf32>
    %122 = tpu.reciprocal %121 {approx = true} : vector<2x8x1xf32> -> vector<2x8x1xf32>
    %123 = vector.broadcast %122 : vector<2x8x1xf32> to vector<2x8x8xf32>
    %124 = arith.mulf %119, %123 : vector<2x8x8xf32>
    "tpu.trace_start"() <{level = 10 : i32, message = "bqk,bkd->bqd"}> : () -> ()
    %cst_30 = arith.constant dense<0.000000e+00> : vector<2x8x32xf32>
    %125 = tpu.matmul %124, %63, %cst_30 {dimension_numbers = #tpu.dot_dimension_numbers<[2], [1], [1], [2], [0, 0, 0, 1, 1, 2], [0], [0]>} : vector<2x8x8xf32>, vector<2x8x32xf32>, vector<2x8x32xf32> -> vector<2x8x32xf32>
    "tpu.trace_stop"() : () -> ()
    %126 = vector.shape_cast %108 : vector<1x32xf32> to vector<1x1x32xf32>
    %127 = vector.broadcast %126 : vector<1x1x32xf32> to vector<2x8x32xf32>
    %128 = arith.mulf %125, %127 : vector<2x8x32xf32>
    %129 = arith.addf %107, %128 : vector<2x8x32xf32>
    %130 = vector.extract_strided_slice %0 {offsets = [18, 0], sizes = [1, 32], strides = [1, 1]} : vector<19x32xf32> to vector<1x32xf32>
    %131 = vector.shape_cast %130 : vector<1x32xf32> to vector<1x1x32xf32>
    %132 = vector.broadcast %131 : vector<1x1x32xf32> to vector<2x8x32xf32>
    %133 = arith.mulf %45, %132 : vector<2x8x32xf32>
    "tpu.trace_start"() <{level = 10 : i32, message = "bqd,bkd->bqk"}> : () -> ()
    %cst_31 = arith.constant dense<0.000000e+00> : vector<2x8x8xf32>
    %134 = tpu.matmul %133, %54, %cst_31 {dimension_numbers = #tpu.dot_dimension_numbers<[2], [2], [1], [1], [0, 0, 0, 1, 1, 1], [0], [0]>} : vector<2x8x32xf32>, vector<2x8x32xf32>, vector<2x8x8xf32> -> vector<2x8x8xf32>
    "tpu.trace_stop"() : () -> ()
    %135 = vector.broadcast %64 : vector<2x1x8xf32> to vector<2x8x8xf32>
    %136 = arith.addf %134, %135 : vector<2x8x8xf32>
    %cst_32 = arith.constant dense<0xFF800000> : vector<2x8xf32>
    %137 = vector.multi_reduction <maximumf>, %136, %cst_32 [2] : vector<2x8x8xf32> to vector<2x8xf32>
    %138 = vector.shape_cast %137 : vector<2x8xf32> to vector<2x8x1xf32>
    %139 = vector.broadcast %138 : vector<2x8x1xf32> to vector<2x8x8xf32>
    %140 = arith.subf %136, %139 : vector<2x8x8xf32>
    %141 = math.exp %140 : vector<2x8x8xf32>
    %cst_33 = arith.constant dense<0.000000e+00> : vector<2x8xf32>
    %142 = vector.multi_reduction <add>, %141, %cst_33 [2] : vector<2x8x8xf32> to vector<2x8xf32>
    %143 = vector.shape_cast %142 : vector<2x8xf32> to vector<2x8x1xf32>
    %144 = tpu.reciprocal %143 {approx = true} : vector<2x8x1xf32> -> vector<2x8x1xf32>
    %145 = vector.broadcast %144 : vector<2x8x1xf32> to vector<2x8x8xf32>
    %146 = arith.mulf %141, %145 : vector<2x8x8xf32>
    "tpu.trace_start"() <{level = 10 : i32, message = "bqk,bkd->bqd"}> : () -> ()
    %cst_34 = arith.constant dense<0.000000e+00> : vector<2x8x32xf32>
    %147 = tpu.matmul %146, %63, %cst_34 {dimension_numbers = #tpu.dot_dimension_numbers<[2], [1], [1], [2], [0, 0, 0, 1, 1, 2], [0], [0]>} : vector<2x8x8xf32>, vector<2x8x32xf32>, vector<2x8x32xf32> -> vector<2x8x32xf32>
    "tpu.trace_stop"() : () -> ()
    %148 = vector.shape_cast %130 : vector<1x32xf32> to vector<1x1x32xf32>
    %149 = vector.broadcast %148 : vector<1x1x32xf32> to vector<2x8x32xf32>
    %150 = arith.mulf %147, %149 : vector<2x8x32xf32>
    %151 = arith.addf %129, %150 : vector<2x8x32xf32>
    %c3 = arith.constant 3 : index
    %c0_35 = arith.constant 0 : index
    %c0_36 = arith.constant 0 : index
    %152 = vector.load %arg3[%c3, %c0_35, %c0_36] : memref<7x32x32xf32, #tpu.memory_space<vmem>>, vector<1x32x32xf32>
    %153 = vector.shape_cast %152 : vector<1x32x32xf32> to vector<32x32xf32>
    %154 = vector.shape_cast %151 : vector<2x8x32xf32> to vector<16x32xf32>
    %cst_37 = arith.constant dense<0.000000e+00> : vector<16x32xf32>
    %155 = tpu.matmul %154, %153, %cst_37 {dimension_numbers = #tpu.dot_dimension_numbers<[1], [0], [0], [1], [0, 0, 1, 1], [], []>} : vector<16x32xf32>, vector<32x32xf32>, vector<16x32xf32> -> vector<16x32xf32>
    %156 = vector.shape_cast %155 : vector<16x32xf32> to vector<2x8x32xf32>
    %157 = vector.extract_strided_slice %0 {offsets = [6, 0], sizes = [1, 32], strides = [1, 1]} : vector<19x32xf32> to vector<1x32xf32>
    %158 = vector.shape_cast %157 : vector<1x32xf32> to vector<1x1x32xf32>
    %159 = vector.broadcast %158 : vector<1x1x32xf32> to vector<2x8x32xf32>
    %160 = arith.addf %156, %159 : vector<2x8x32xf32>
    %161 = vector.extract_strided_slice %0 {offsets = [7, 0], sizes = [1, 32], strides = [1, 1]} : vector<19x32xf32> to vector<1x32xf32>
    %162 = vector.extract_strided_slice %0 {offsets = [8, 0], sizes = [1, 32], strides = [1, 1]} : vector<19x32xf32> to vector<1x32xf32>
    %163 = arith.addf %160, %18 : vector<2x8x32xf32>
    %cst_38 = arith.constant dense<0.000000e+00> : vector<2x8xf32>
    %164 = vector.multi_reduction <add>, %163, %cst_38 [2] : vector<2x8x32xf32> to vector<2x8xf32>
    %165 = vector.shape_cast %164 : vector<2x8xf32> to vector<2x8x1xf32>
    %cst_39 = arith.constant 3.200000e+01 : f32
    %166 = vector.broadcast %cst_39 : f32 to vector<2x8x1xf32>
    %167 = arith.divf %165, %166 : vector<2x8x1xf32>
    %168 = vector.broadcast %167 : vector<2x8x1xf32> to vector<2x8x32xf32>
    %169 = arith.subf %163, %168 : vector<2x8x32xf32>
    %170 = arith.mulf %169, %169 : vector<2x8x32xf32>
    %cst_40 = arith.constant dense<0.000000e+00> : vector<2x8xf32>
    %171 = vector.multi_reduction <add>, %170, %cst_40 [2] : vector<2x8x32xf32> to vector<2x8xf32>
    %172 = vector.shape_cast %171 : vector<2x8xf32> to vector<2x8x1xf32>
    %cst_41 = arith.constant 3.200000e+01 : f32
    %173 = vector.broadcast %cst_41 : f32 to vector<2x8x1xf32>
    %174 = arith.divf %172, %173 : vector<2x8x1xf32>
    %175 = vector.broadcast %167 : vector<2x8x1xf32> to vector<2x8x32xf32>
    %176 = arith.subf %163, %175 : vector<2x8x32xf32>
    %cst_42 = arith.constant 9.99999974E-6 : f32
    %177 = vector.broadcast %cst_42 : f32 to vector<2x8x1xf32>
    %178 = arith.addf %174, %177 : vector<2x8x1xf32>
    %179 = math.rsqrt %178 : vector<2x8x1xf32>
    %180 = vector.broadcast %179 : vector<2x8x1xf32> to vector<2x8x32xf32>
    %181 = arith.mulf %176, %180 : vector<2x8x32xf32>
    %182 = vector.shape_cast %161 : vector<1x32xf32> to vector<1x1x32xf32>
    %183 = vector.broadcast %182 : vector<1x1x32xf32> to vector<2x8x32xf32>
    %184 = arith.mulf %181, %183 : vector<2x8x32xf32>
    %185 = vector.shape_cast %162 : vector<1x32xf32> to vector<1x1x32xf32>
    %186 = vector.broadcast %185 : vector<1x1x32xf32> to vector<2x8x32xf32>
    %187 = arith.addf %184, %186 : vector<2x8x32xf32>
    %c4 = arith.constant 4 : index
    %c0_43 = arith.constant 0 : index
    %c0_44 = arith.constant 0 : index
    %188 = vector.load %arg3[%c4, %c0_43, %c0_44] : memref<7x32x32xf32, #tpu.memory_space<vmem>>, vector<1x32x32xf32>
    %189 = vector.shape_cast %188 : vector<1x32x32xf32> to vector<32x32xf32>
    %190 = vector.shape_cast %187 : vector<2x8x32xf32> to vector<16x32xf32>
    %cst_45 = arith.constant dense<0.000000e+00> : vector<16x32xf32>
    %191 = tpu.matmul %190, %189, %cst_45 {dimension_numbers = #tpu.dot_dimension_numbers<[1], [0], [0], [1], [0, 0, 1, 1], [], []>} : vector<16x32xf32>, vector<32x32xf32>, vector<16x32xf32> -> vector<16x32xf32>
    %192 = vector.shape_cast %191 : vector<16x32xf32> to vector<2x8x32xf32>
    %193 = vector.extract_strided_slice %0 {offsets = [9, 0], sizes = [1, 32], strides = [1, 1]} : vector<19x32xf32> to vector<1x32xf32>
    %194 = vector.shape_cast %193 : vector<1x32xf32> to vector<1x1x32xf32>
    %195 = vector.broadcast %194 : vector<1x1x32xf32> to vector<2x8x32xf32>
    %196 = arith.addf %192, %195 : vector<2x8x32xf32>
    %cst_46 = arith.constant 0.000000e+00 : f32
    %197 = vector.broadcast %cst_46 : f32 to vector<2x8x32xf32>
    %198 = arith.maximumf %196, %197 : vector<2x8x32xf32>
    %c5 = arith.constant 5 : index
    %c0_47 = arith.constant 0 : index
    %c0_48 = arith.constant 0 : index
    %199 = vector.load %arg3[%c5, %c0_47, %c0_48] : memref<7x32x32xf32, #tpu.memory_space<vmem>>, vector<1x32x32xf32>
    %200 = vector.shape_cast %199 : vector<1x32x32xf32> to vector<32x32xf32>
    %201 = vector.shape_cast %198 : vector<2x8x32xf32> to vector<16x32xf32>
    %cst_49 = arith.constant dense<0.000000e+00> : vector<16x32xf32>
    %202 = tpu.matmul %201, %200, %cst_49 {dimension_numbers = #tpu.dot_dimension_numbers<[1], [0], [0], [1], [0, 0, 1, 1], [], []>} : vector<16x32xf32>, vector<32x32xf32>, vector<16x32xf32> -> vector<16x32xf32>
    %203 = vector.shape_cast %202 : vector<16x32xf32> to vector<2x8x32xf32>
    %204 = vector.extract_strided_slice %0 {offsets = [10, 0], sizes = [1, 32], strides = [1, 1]} : vector<19x32xf32> to vector<1x32xf32>
    %205 = vector.shape_cast %204 : vector<1x32xf32> to vector<1x1x32xf32>
    %206 = vector.broadcast %205 : vector<1x1x32xf32> to vector<2x8x32xf32>
    %207 = arith.addf %203, %206 : vector<2x8x32xf32>
    %208 = arith.addf %207, %18 : vector<2x8x32xf32>
    %cst_50 = arith.constant dense<0.000000e+00> : vector<2x8xf32>
    %209 = vector.multi_reduction <add>, %208, %cst_50 [2] : vector<2x8x32xf32> to vector<2x8xf32>
    %210 = vector.shape_cast %209 : vector<2x8xf32> to vector<2x8x1xf32>
    %cst_51 = arith.constant 3.200000e+01 : f32
    %211 = vector.broadcast %cst_51 : f32 to vector<2x8x1xf32>
    %212 = arith.divf %210, %211 : vector<2x8x1xf32>
    %213 = vector.broadcast %212 : vector<2x8x1xf32> to vector<2x8x32xf32>
    %214 = arith.subf %208, %213 : vector<2x8x32xf32>
    %215 = arith.mulf %214, %214 : vector<2x8x32xf32>
    %cst_52 = arith.constant dense<0.000000e+00> : vector<2x8xf32>
    %216 = vector.multi_reduction <add>, %215, %cst_52 [2] : vector<2x8x32xf32> to vector<2x8xf32>
    %217 = vector.shape_cast %216 : vector<2x8xf32> to vector<2x8x1xf32>
    %cst_53 = arith.constant 3.200000e+01 : f32
    %218 = vector.broadcast %cst_53 : f32 to vector<2x8x1xf32>
    %219 = arith.divf %217, %218 : vector<2x8x1xf32>
    %220 = vector.broadcast %212 : vector<2x8x1xf32> to vector<2x8x32xf32>
    %221 = arith.subf %208, %220 : vector<2x8x32xf32>
    %cst_54 = arith.constant 9.99999974E-6 : f32
    %222 = vector.broadcast %cst_54 : f32 to vector<2x8x1xf32>
    %223 = arith.addf %219, %222 : vector<2x8x1xf32>
    %224 = math.rsqrt %223 : vector<2x8x1xf32>
    %225 = vector.broadcast %224 : vector<2x8x1xf32> to vector<2x8x32xf32>
    %226 = arith.mulf %221, %225 : vector<2x8x32xf32>
    %227 = vector.shape_cast %161 : vector<1x32xf32> to vector<1x1x32xf32>
    %228 = vector.broadcast %227 : vector<1x1x32xf32> to vector<2x8x32xf32>
    %229 = arith.mulf %226, %228 : vector<2x8x32xf32>
    %230 = vector.shape_cast %162 : vector<1x32xf32> to vector<1x1x32xf32>
    %231 = vector.broadcast %230 : vector<1x1x32xf32> to vector<2x8x32xf32>
    %232 = arith.addf %229, %231 : vector<2x8x32xf32>
    %cst_55 = arith.constant dense<0.000000e+00> : vector<2x32xf32>
    %233 = vector.multi_reduction <add>, %232, %cst_55 [1] : vector<2x8x32xf32> to vector<2x32xf32>
    %cst_56 = arith.constant 8.000000e+00 : f32
    %234 = vector.broadcast %cst_56 : f32 to vector<2x32xf32>
    %235 = arith.divf %233, %234 : vector<2x32xf32>
    %c6 = arith.constant 6 : index
    %c0_57 = arith.constant 0 : index
    %c0_58 = arith.constant 0 : index
    %236 = vector.load %arg3[%c6, %c0_57, %c0_58] : memref<7x32x32xf32, #tpu.memory_space<vmem>>, vector<1x32x32xf32>
    %237 = vector.shape_cast %236 : vector<1x32x32xf32> to vector<32x32xf32>
    %cst_59 = arith.constant dense<0.000000e+00> : vector<2x32xf32>
    %238 = tpu.matmul %235, %237, %cst_59 {dimension_numbers = #tpu.dot_dimension_numbers<[1], [0], [0], [1], [0, 0, 1, 1], [], []>} : vector<2x32xf32>, vector<32x32xf32>, vector<2x32xf32> -> vector<2x32xf32>
    %239 = vector.extract_strided_slice %0 {offsets = [11, 0], sizes = [1, 32], strides = [1, 1]} : vector<19x32xf32> to vector<1x32xf32>
    %240 = vector.broadcast %239 : vector<1x32xf32> to vector<2x32xf32>
    %241 = arith.addf %238, %240 : vector<2x32xf32>
    %cst_60 = arith.constant 0.000000e+00 : f32
    %242 = vector.broadcast %cst_60 : f32 to vector<2x32xf32>
    %243 = arith.maximumf %241, %242 : vector<2x32xf32>
    %244 = vector.extract_strided_slice %0 {offsets = [12, 0], sizes = [2, 32], strides = [1, 1]} : vector<19x32xf32> to vector<2x32xf32>
    %cst_61 = arith.constant dense<0.000000e+00> : vector<2x2xf32>
    %245 = tpu.matmul %243, %244, %cst_61 {dimension_numbers = #tpu.dot_dimension_numbers<[1], [1], [0], [0], [0, 0, 1, 0], [], []>} : vector<2x32xf32>, vector<2x32xf32>, vector<2x2xf32> -> vector<2x2xf32>
    %246 = vector.extract_strided_slice %0 {offsets = [14, 0], sizes = [1, 2], strides = [1, 1]} : vector<19x32xf32> to vector<1x2xf32>
    %247 = vector.broadcast %246 : vector<1x2xf32> to vector<2x2xf32>
    %248 = arith.addf %245, %247 : vector<2x2xf32>
    %c0_62 = arith.constant 0 : index
    %c0_63 = arith.constant 0 : index
    %249 = vector.load %arg5[%c0_62, %c0_63] : memref<2x2xf32, #tpu.memory_space<vmem>>, vector<2x2xf32>
    tpu.vector_store %arg5[%c0_62, %c0_63], %248 {strides = array<i32>} : memref<2x2xf32, #tpu.memory_space<vmem>>, vector<2x2xf32>,
    return
  }
}

</mosaic_0001>

<llo_original>
// kernel: cross_attention_center_estimator.1
$region0: #{cross_attention_center_estimator.1}
  #allocation0 [shape = 'u32[]', space=smem, size = 0x4, offset = 0x4, fixed_abs, tag = 'smem constant byte address 0x4 - core index']
  #allocation1 [shape = 'u32[144,128]{1,0:T(1,128)}', space=vmem, size = 0x12000, scoped, tag = 'internal scratch']
  %s0 = inlined_call_operand.vmem [shape: f32[2,8,2], index: 0, kind: input, shape index: {}]
  %s1 = inlined_call_operand.vmem [shape: f32[2,8,2], index: 1, kind: input, shape index: {}]
  %s2 = inlined_call_operand.vmem [shape: f32[2,1,8], index: 2, kind: input, shape index: {}]
  %s3 = inlined_call_operand.hbm [shape: f32[7,32,32], index: 3, kind: input, shape index: {}]
  %s4 = inlined_call_operand.vmem [shape: f32[19,32], index: 4, kind: input, shape index: {}]
  %s5 = inlined_call_operand.hbm [shape: f32[2,2], index: 5, kind: output, shape index: {}]
  %s6 = sld [smem:[#allocation0]]
  $region34: #{cross_attention_center_estimator.1} parent=0
    _
  %s8 = ssub.s32 1, %s6
  %s9 = scalar_select 0, %s8, %s6
  $region1: #{cross_attention_center_estimator.1} parent=0
    #allocation2 [shape = 'u8[114688]{0}', space=vmem, size = 0x1c000, scoped, tag = 'input window, operand 3, single buffered']
    #allocation3 [shape = 's32[1]{0}', space=sflag, size = 0x4, scoped, tag = 'scoped memory for cross_attention_center_estimator.1']
    #allocation4 [shape = 's32[1]{0}', space=sflag, size = 0x4, scoped, tag = 'scoped memory for cross_attention_center_estimator.1']
    #allocation5 [shape = 'u8[1024]{0}', space=vmem, size = 0x400, scoped, tag = 'output window, operand 0, single buffered']
    %10 = vsyncpa [#allocation3], 0
    %11 = vsyncpa [#allocation4], 0
    // Predicated region
    $region2: #{cross_attention_center_estimator.1} parent=1 // pred_check
      _
    $region3: #{cross_attention_center_estimator.1} parent=1 // pred_check_branch
      %13 = sbr.rel (0) target = $region5
    $region4: #{cross_attention_center_estimator.1} parent=1 // pred_region
      _
    $region5: #{cross_attention_center_estimator.1} parent=1 // pred_fallthru
      _
    // Predicated region
    $region6: #{cross_attention_center_estimator.1} parent=1 // pred_check
      _
    $region7: #{cross_attention_center_estimator.1} parent=1 // pred_check_branch
      %15 = sbr.rel (0) target = $region9
    $region8: #{cross_attention_center_estimator.1} parent=1 // pred_region
      _
    $region9: #{cross_attention_center_estimator.1} parent=1 // pred_fallthru
      _
    // Predicated region
    $region10: #{cross_attention_center_estimator.1} parent=1 // pred_check
      _
    $region11: #{cross_attention_center_estimator.1} parent=1 // pred_check_branch
      %17 = sbr.rel (0) target = $region13
    $region12: #{cross_attention_center_estimator.1} parent=1 // pred_region
      _
    $region13: #{cross_attention_center_estimator.1} parent=1 // pred_fallthru
      _
    // Predicated region
    $region14: #{cross_attention_center_estimator.1} parent=1 // pred_check
      _
    $region15: #{cross_attention_center_estimator.1} parent=1 // pred_check_branch
      %19 = sbr.rel (0) target = $region17
    $region16: #{cross_attention_center_estimator.1} parent=1 // pred_region
      %s21 = ssub.s32 3584, 3584
      %22 = vsyncadd [#allocation3], %s21
      %s23 = sshll.u32 [#allocation2], 4
      %s24 = int_to_ptr.vmem [resolvable:$true] %s23
      %29 = dma.hbm_to_vmem [thread:$0]  %s3, 3584, %s24, [#allocation3], 128, 128, 8
    $region17: #{cross_attention_center_estimator.1} parent=1 // pred_fallthru
      _
    // Predicated region
    $region18: #{cross_attention_center_estimator.1} parent=1 // pred_check
      _
    $region19: #{cross_attention_center_estimator.1} parent=1 // pred_check_branch
      %31 = sbr.rel (0) target = $region21
    $region20: #{cross_attention_center_estimator.1} parent=1 // pred_region
      _
    $region21: #{cross_attention_center_estimator.1} parent=1 // pred_fallthru
      _
    // Predicated region
    $region22: #{cross_attention_center_estimator.1} parent=1 // pred_check
      _
    $region23: #{cross_attention_center_estimator.1} parent=1 // pred_check_branch
      %33 = sbr.rel (0) target = $region25
    $region24: #{cross_attention_center_estimator.1} parent=1 // pred_region
      %34 = dma.done [#allocation3], 3584
    $region25: #{cross_attention_center_estimator.1} parent=1 // pred_fallthru
      _
    %v35 = vld [vmem:[%s4] sm:$0xff]
    %v36 = vld [vmem:[%s4 + $0x8] sm:$0xff]
    %v37 = vld [vmem:[%s4 + $0x10] sm:$0x7]
    %v38 = vld [vmem:[%s0] sm:$0xff]
    %v39 = vld [vmem:[%s0 + $0x8] sm:$0xff]
    %41 = vset.pattern.permute.xlu0 0
    %42 = vperm.xlu0 %41, %v38
    %v43 = vpop.permute.xlu0 %42
    %46 = vset.pattern.permute.xlu0 0
    %47 = vperm.xlu0 %46, %v39
    %v48 = vpop.permute.xlu0 %47
    %v50 = vlaneseq
    %v51 = vshrl.u32 %v50, 7
    %v52 = vsub.s32 0, %v51
    %v53 = vrot.slane %v35, %v52
    %v54 = vmul.f32 %v43, %v53
    %v55 = vmul.f32 %v48, %v53
    %56 = vset.pattern.permute.xlu0 1
    %57 = vperm.xlu0 %56, %v38
    %v58 = vpop.permute.xlu0 %57
    %60 = vset.pattern.permute.xlu0 1
    %61 = vperm.xlu0 %60, %v39
    %v62 = vpop.permute.xlu0 %61
    %v64 = vlaneseq
    %v65 = vshrl.u32 %v64, 7
    %v66 = vsub.s32 1, %v65
    %v67 = vrot.slane %v35, %v66
    %v68 = vmul.f32 %v58, %v67
    %v69 = vmul.f32 %v62, %v67
    %v70 = vadd.f32 %v54, %v68
    %v71 = vadd.f32 %v55, %v69
    %v72 = vlaneseq
    %v73 = vshrl.u32 %v72, 7
    %v74 = vsub.s32 2, %v73
    %v75 = vrot.slane %v35, %v74
    %v76 = vadd.f32 %v70, %v75
    %v77 = vadd.f32 %v71, %v75
    %v78 = vld [vmem:[%s1] sm:$0xff]
    %v79 = vld [vmem:[%s1 + $0x8] sm:$0xff]
    %81 = vset.pattern.permute.xlu0 0
    %82 = vperm.xlu0 %81, %v78
    %v83 = vpop.permute.xlu0 %82
    %86 = vset.pattern.permute.xlu0 0
    %87 = vperm.xlu0 %86, %v79
    %v88 = vpop.permute.xlu0 %87
    %v90 = vmul.f32 %v83, %v53
    %v91 = vmul.f32 %v88, %v53
    %92 = vset.pattern.permute.xlu0 1
    %93 = vperm.xlu0 %92, %v78
    %v94 = vpop.permute.xlu0 %93
    %96 = vset.pattern.permute.xlu0 1
    %97 = vperm.xlu0 %96, %v79
    %v98 = vpop.permute.xlu0 %97
    %v100 = vmul.f32 %v94, %v67
    %v101 = vmul.f32 %v98, %v67
    %v102 = vadd.f32 %v90, %v100
    %v103 = vadd.f32 %v91, %v101
    %v104 = vadd.f32 %v102, %v75
    %v105 = vadd.f32 %v103, %v75
    %v106 = vld [vmem:[#allocation2] sm:$0xff]
    %v107 = vld [vmem:[#allocation2 + $0x8] sm:$0xff]
    %v108 = vld [vmem:[#allocation2 + $0x10] sm:$0xff]
    %v109 = vld [vmem:[#allocation2 + $0x18] sm:$0xff]
    %vm110 = vcmask 261120
    %v112 = vsel %vm110, %v76, 0
    %v115 = vsel %vm110, %v77, 0
    %117 = vmatprep.subr.mxu0 0.0
    %118 = vmatpush1.msra.mxu0 0.0
    %119 = vmatprep.subr.mxu0 0.0
    %120 = vmatpush1.msra.mxu0 0.0
    %121 = vmatprep.subr.mxu0 0.0
    %122 = vmatpush1.msra.mxu0 0.0
    %123 = vmatprep.subr.mxu0 0.0
    %124 = vmatpush1.msra.mxu0 0.0
    %125 = vmatprep.subr.mxu0 0.0
    %126 = vmatpush1.msra.mxu0 0.0
    %127 = vmatprep.subr.mxu0 0.0
    %128 = vmatpush1.msra.mxu0 0.0
    %129 = vmatprep.subr.mxu0 0.0
    %130 = vmatpush1.msra.mxu0 0.0
    %131 = vmatprep.subr.mxu0 0.0
    %132 = vmatpush1.msra.mxu0 0.0
    %133 = vmatprep.subr.mxu0 0.0
    %134 = vmatpush1.msra.mxu0 0.0
    %135 = vmatprep.subr.mxu0 0.0
    %136 = vmatpush1.msra.mxu0 0.0
    %137 = vmatprep.subr.mxu0 0.0
    %138 = vmatpush1.msra.mxu0 0.0
    %139 = vmatprep.subr.mxu0 0.0
    %140 = vmatpush1.msra.mxu0 0.0
    %141 = vmatprep.subr.mxu0 0.0
    %142 = vmatpush1.msra.mxu0 %v109
    %143 = vmatprep.subr.mxu0 0.0
    %144 = vmatpush1.msra.mxu0 %v108
    %145 = vmatprep.subr.mxu0 0.0
    %146 = vmatpush1.msra.mxu0 %v107
    %147 = vmatprep.subr.mxu0 0.0
    %148 = vmatpush1.msra.mxu0 %v106
    %149 = vmatprep.subr.mxu0 0.0
    %150 = vmatpush2.msra.mxu0 0.0
    %151 = vmatprep.subr.mxu0 0.0
    %152 = vmatpush2.msra.mxu0 0.0
    %153 = vmatprep.subr.mxu0 0.0
    %154 = vmatpush2.msra.mxu0 0.0
    %155 = vmatprep.subr.mxu0 0.0
    %156 = vmatpush2.msra.mxu0 0.0
    %157 = vmatprep.subr.mxu0 0.0
    %158 = vmatpush2.msra.mxu0 0.0
    %159 = vmatprep.subr.mxu0 0.0
    %160 = vmatpush2.msra.mxu0 0.0
    %161 = vmatprep.subr.mxu0 0.0
    %162 = vmatpush2.msra.mxu0 0.0
    %163 = vmatprep.subr.mxu0 0.0
    %164 = vmatpush2.msra.mxu0 0.0
    %165 = vmatprep.subr.mxu0 0.0
    %166 = vmatpush2.msra.mxu0 0.0
    %167 = vmatprep.subr.mxu0 0.0
    %168 = vmatpush2.msra.mxu0 0.0
    %169 = vmatprep.subr.mxu0 0.0
    %170 = vmatpush2.msra.mxu0 0.0
    %171 = vmatprep.subr.mxu0 0.0
    %172 = vmatpush2.msra.mxu0 0.0
    %173 = vmatprep.subr.mxu0 0.0
    %174 = vmatpush2.msra.mxu0 0.0
    %175 = vmatprep.subr.mxu0 0.0
    %176 = vmatpush2.msra.mxu0 0.0
    %177 = vmatprep.subr.mxu0 0.0
    %178 = vmatpush2.msra.mxu0 0.0
    %179 = vmatprep.subr.mxu0 0.0
    %180 = vmatpush2.msra.mxu0 0.0
    %181 = vmatprep.mubr.f32.mxu0 0.0
    %182 = vmatmul.mubr.f32.gmra.mxu0 %v112
    %v183 = vpop.f32.mrf.mxu0
    %v184 = vadd.f32 0.0, %v183
    %v185 = vpop.f32.mrf.mxu0
    %186 = vmatprep.mubr.f32.mxu0 0.0
    %187 = vmatmul.mubr.f32.gmra.mxu0 %v115
    %v188 = vpop.f32.mrf.mxu0
    %v189 = vadd.f32 0.0, %v188
    %v190 = vpop.f32.mrf.mxu0
    %191 = vdwg.mxu0
    %v192 = vlaneseq
    %v193 = vshrl.u32 %v192, 7
    %v194 = vsub.s32 3, %v193
    %v195 = vrot.slane %v35, %v194
    %v196 = vadd.f32 %v184, %v195
    %v197 = vadd.f32 %v189, %v195
    %s198 = scalar_lea.vmem [#allocation2], 32
    %v199 = vld [vmem:[%s198] sm:$0xff]
    %v200 = vld [vmem:[%s198 + $0x8] sm:$0xff]
    %v201 = vld [vmem:[%s198 + $0x10] sm:$0xff]
    %v202 = vld [vmem:[%s198 + $0x18] sm:$0xff]
    %v204 = vsel %vm110, %v104, 0
    %v207 = vsel %vm110, %v105, 0
    %209 = vmatprep.subr.mxu0 0.0
    %210 = vmatpush1.msra.mxu0 0.0
    %211 = vmatprep.subr.mxu0 0.0
    %212 = vmatpush1.msra.mxu0 0.0
    %213 = vmatprep.subr.mxu0 0.0
    %214 = vmatpush1.msra.mxu0 0.0
    %215 = vmatprep.subr.mxu0 0.0
    %216 = vmatpush1.msra.mxu0 0.0
    %217 = vmatprep.subr.mxu0 0.0
    %218 = vmatpush1.msra.mxu0 0.0
    %219 = vmatprep.subr.mxu0 0.0
    %220 = vmatpush1.msra.mxu0 0.0
    %221 = vmatprep.subr.mxu0 0.0
    %222 = vmatpush1.msra.mxu0 0.0
    %223 = vmatprep.subr.mxu0 0.0
    %224 = vmatpush1.msra.mxu0 0.0
    %225 = vmatprep.subr.mxu0 0.0
    %226 = vmatpush1.msra.mxu0 0.0
    %227 = vmatprep.subr.mxu0 0.0
    %228 = vmatpush1.msra.mxu0 0.0
    %229 = vmatprep.subr.mxu0 0.0
    %230 = vmatpush1.msra.mxu0 0.0
    %231 = vmatprep.subr.mxu0 0.0
    %232 = vmatpush1.msra.mxu0 0.0
    %233 = vmatprep.subr.mxu0 0.0
    %234 = vmatpush1.msra.mxu0 %v202
    %235 = vmatprep.subr.mxu0 0.0
    %236 = vmatpush1.msra.mxu0 %v201
    %237 = vmatprep.subr.mxu0 0.0
    %238 = vmatpush1.msra.mxu0 %v200
    %239 = vmatprep.subr.mxu0 0.0
    %240 = vmatpush1.msra.mxu0 %v199
    %241 = vmatprep.subr.mxu0 0.0
    %242 = vmatpush2.msra.mxu0 0.0
    %243 = vmatprep.subr.mxu0 0.0
    %244 = vmatpush2.msra.mxu0 0.0
    %245 = vmatprep.subr.mxu0 0.0
    %246 = vmatpush2.msra.mxu0 0.0
    %247 = vmatprep.subr.mxu0 0.0
    %248 = vmatpush2.msra.mxu0 0.0
    %249 = vmatprep.subr.mxu0 0.0
    %250 = vmatpush2.msra.mxu0 0.0
    %251 = vmatprep.subr.mxu0 0.0
    %252 = vmatpush2.msra.mxu0 0.0
    %253 = vmatprep.subr.mxu0 0.0
    %254 = vmatpush2.msra.mxu0 0.0
    %255 = vmatprep.subr.mxu0 0.0
    %256 = vmatpush2.msra.mxu0 0.0
    %257 = vmatprep.subr.mxu0 0.0
    %258 = vmatpush2.msra.mxu0 0.0
    %259 = vmatprep.subr.mxu0 0.0
    %260 = vmatpush2.msra.mxu0 0.0
    %261 = vmatprep.subr.mxu0 0.0
    %262 = vmatpush2.msra.mxu0 0.0
    %263 = vmatprep.subr.mxu0 0.0
    %264 = vmatpush2.msra.mxu0 0.0
    %265 = vmatprep.subr.mxu0 0.0
    %266 = vmatpush2.msra.mxu0 0.0
    %267 = vmatprep.subr.mxu0 0.0
    %268 = vmatpush2.msra.mxu0 0.0
    %269 = vmatprep.subr.mxu0 0.0
    %270 = vmatpush2.msra.mxu0 0.0
    %271 = vmatprep.subr.mxu0 0.0
    %272 = vmatpush2.msra.mxu0 0.0
    %273 = vmatprep.mubr.f32.mxu0 0.0
    %274 = vmatmul.mubr.f32.gmra.mxu0 %v204
    %v275 = vpop.f32.mrf.mxu0
    %v276 = vadd.f32 0.0, %v275
    %v277 = vpop.f32.mrf.mxu0
    %278 = vmatprep.mubr.f32.mxu0 0.0
    %279 = vmatmul.mubr.f32.gmra.mxu0 %v207
    %v280 = vpop.f32.mrf.mxu0
    %v281 = vadd.f32 0.0, %v280
    %v282 = vpop.f32.mrf.mxu0
    %283 = vdwg.mxu0
    %v284 = vlaneseq
    %v285 = vshrl.u32 %v284, 7
    %v286 = vsub.s32 4, %v285
    %v287 = vrot.slane %v35, %v286
    %v288 = vadd.f32 %v276, %v287
    %v289 = vadd.f32 %v281, %v287
    %s290 = scalar_lea.vmem [#allocation2], 64
    %v291 = vld [vmem:[%s290] sm:$0xff]
    %v292 = vld [vmem:[%s290 + $0x8] sm:$0xff]
    %v293 = vld [vmem:[%s290 + $0x10] sm:$0xff]
    %v294 = vld [vmem:[%s290 + $0x18] sm:$0xff]
    %295 = vmatprep.subr.mxu0 0.0
    %296 = vmatpush1.msra.mxu0 0.0
    %297 = vmatprep.subr.mxu0 0.0
    %298 = vmatpush1.msra.mxu0 0.0
    %299 = vmatprep.subr.mxu0 0.0
    %300 = vmatpush1.msra.mxu0 0.0
    %301 = vmatprep.subr.mxu0 0.0
    %302 = vmatpush1.msra.mxu0 0.0
    %303 = vmatprep.subr.mxu0 0.0
    %304 = vmatpush1.msra.mxu0 0.0
    %305 = vmatprep.subr.mxu0 0.0
    %306 = vmatpush1.msra.mxu0 0.0
    %307 = vmatprep.subr.mxu0 0.0
    %308 = vmatpush1.msra.mxu0 0.0
    %309 = vmatprep.subr.mxu0 0.0
    %310 = vmatpush1.msra.mxu0 0.0
    %311 = vmatprep.subr.mxu0 0.0
    %312 = vmatpush1.msra.mxu0 0.0
    %313 = vmatprep.subr.mxu0 0.0
    %314 = vmatpush1.msra.mxu0 0.0
    %315 = vmatprep.subr.mxu0 0.0
    %316 = vmatpush1.msra.mxu0 0.0
    %317 = vmatprep.subr.mxu0 0.0
    %318 = vmatpush1.msra.mxu0 0.0
    %319 = vmatprep.subr.mxu0 0.0
    %320 = vmatpush1.msra.mxu0 %v294
    %321 = vmatprep.subr.mxu0 0.0
    %322 = vmatpush1.msra.mxu0 %v293
    %323 = vmatprep.subr.mxu0 0.0
    %324 = vmatpush1.msra.mxu0 %v292
    %325 = vmatprep.subr.mxu0 0.0
    %326 = vmatpush1.msra.mxu0 %v291
    %327 = vmatprep.subr.mxu0 0.0
    %328 = vmatpush2.msra.mxu0 0.0
    %329 = vmatprep.subr.mxu0 0.0
    %330 = vmatpush2.msra.mxu0 0.0
    %331 = vmatprep.subr.mxu0 0.0
    %332 = vmatpush2.msra.mxu0 0.0
    %333 = vmatprep.subr.mxu0 0.0
    %334 = vmatpush2.msra.mxu0 0.0
    %335 = vmatprep.subr.mxu0 0.0
    %336 = vmatpush2.msra.mxu0 0.0
    %337 = vmatprep.subr.mxu0 0.0
    %338 = vmatpush2.msra.mxu0 0.0
    %339 = vmatprep.subr.mxu0 0.0
    %340 = vmatpush2.msra.mxu0 0.0
    %341 = vmatprep.subr.mxu0 0.0
    %342 = vmatpush2.msra.mxu0 0.0
    %343 = vmatprep.subr.mxu0 0.0
    %344 = vmatpush2.msra.mxu0 0.0
    %345 = vmatprep.subr.mxu0 0.0
    %346 = vmatpush2.msra.mxu0 0.0
    %347 = vmatprep.subr.mxu0 0.0
    %348 = vmatpush2.msra.mxu0 0.0
    %349 = vmatprep.subr.mxu0 0.0
    %350 = vmatpush2.msra.mxu0 0.0
    %351 = vmatprep.subr.mxu0 0.0
    %352 = vmatpush2.msra.mxu0 0.0
    %353 = vmatprep.subr.mxu0 0.0
    %354 = vmatpush2.msra.mxu0 0.0
    %355 = vmatprep.subr.mxu0 0.0
    %356 = vmatpush2.msra.mxu0 0.0
    %357 = vmatprep.subr.mxu0 0.0
    %358 = vmatpush2.msra.mxu0 0.0
    %359 = vmatprep.mubr.f32.mxu0 0.0
    %360 = vmatmul.mubr.f32.gmra.mxu0 %v204
    %v361 = vpop.f32.mrf.mxu0
    %v362 = vadd.f32 0.0, %v361
    %v363 = vpop.f32.mrf.mxu0
    %364 = vmatprep.mubr.f32.mxu0 0.0
    %365 = vmatmul.mubr.f32.gmra.mxu0 %v207
    %v366 = vpop.f32.mrf.mxu0
    %v367 = vadd.f32 0.0, %v366
    %v368 = vpop.f32.mrf.mxu0
    %369 = vdwg.mxu0
    %v370 = vlaneseq
    %v371 = vshrl.u32 %v370, 7
    %v372 = vsub.s32 5, %v371
    %v373 = vrot.slane %v35, %v372
    %v374 = vadd.f32 %v362, %v373
    %v375 = vadd.f32 %v367, %v373
    %v376 = vld [vmem:[%s2] sm:$0x1]
    %v377 = vld [vmem:[%s2 + $0x1] sm:$0x1]
    %v378 = vlaneseq
    %v379 = vshrl.u32 %v378, 7
    %v380 = vsub.s32 7, %v379
    %v381 = vrot.slane %v36, %v380
    %v382 = vmul.f32 %v196, %v381
    %v383 = vmul.f32 %v197, %v381
    %v386 = vlaneseq
    %v387 = vshrl.u32 %v386, 7
    %v388 = vsub.s32 0, %v387
    %v389 = vrot.slane %v376, %v388
    %v390 = vlaneseq
    %v391 = vshrl.u32 %v390, 7
    %v392 = vsub.s32 0, %v391
    %v393 = vrot.slane %v377, %v392
    %v397 = vsel %vm110, %v382, 0
    %v400 = vsel %vm110, %v288, 0
    %402 = vmatprep.subr.mxu0 0.0
    %403 = vmatpush1.xpose.msra.mxu0 0.0
    %404 = vmatprep.subr.mxu0 0.0
    %405 = vmatpush1.xpose.msra.mxu0 0.0
    %406 = vmatprep.subr.mxu0 0.0
    %407 = vmatpush1.xpose.msra.mxu0 0.0
    %408 = vmatprep.subr.mxu0 0.0
    %409 = vmatpush1.xpose.msra.mxu0 0.0
    %410 = vmatprep.subr.mxu0 0.0
    %411 = vmatpush1.xpose.msra.mxu0 0.0
    %412 = vmatprep.subr.mxu0 0.0
    %413 = vmatpush1.xpose.msra.mxu0 0.0
    %414 = vmatprep.subr.mxu0 0.0
    %415 = vmatpush1.xpose.msra.mxu0 0.0
    %416 = vmatprep.subr.mxu0 0.0
    %417 = vmatpush1.xpose.msra.mxu0 0.0
    %418 = vmatprep.subr.mxu0 0.0
    %419 = vmatpush1.xpose.msra.mxu0 0.0
    %420 = vmatprep.subr.mxu0 0.0
    %421 = vmatpush1.xpose.msra.mxu0 0.0
    %422 = vmatprep.subr.mxu0 0.0
    %423 = vmatpush1.xpose.msra.mxu0 0.0
    %424 = vmatprep.subr.mxu0 0.0
    %425 = vmatpush1.xpose.msra.mxu0 0.0
    %426 = vmatprep.subr.mxu0 0.0
    %427 = vmatpush1.xpose.msra.mxu0 0.0
    %428 = vmatprep.subr.mxu0 0.0
    %429 = vmatpush1.xpose.msra.mxu0 0.0
    %430 = vmatprep.subr.mxu0 0.0
    %431 = vmatpush1.xpose.msra.mxu0 0.0
    %432 = vmatprep.subr.mxu0 0.0
    %433 = vmatpush1.xpose.msra.mxu0 %v400
    %434 = vmatprep.subr.mxu0 0.0
    %435 = vmatpush2.xpose.msra.mxu0 0.0
    %436 = vmatprep.subr.mxu0 0.0
    %437 = vmatpush2.xpose.msra.mxu0 0.0
    %438 = vmatprep.subr.mxu0 0.0
    %439 = vmatpush2.xpose.msra.mxu0 0.0
    %440 = vmatprep.subr.mxu0 0.0
    %441 = vmatpush2.xpose.msra.mxu0 0.0
    %442 = vmatprep.subr.mxu0 0.0
    %443 = vmatpush2.xpose.msra.mxu0 0.0
    %444 = vmatprep.subr.mxu0 0.0
    %445 = vmatpush2.xpose.msra.mxu0 0.0
    %446 = vmatprep.subr.mxu0 0.0
    %447 = vmatpush2.xpose.msra.mxu0 0.0
    %448 = vmatprep.subr.mxu0 0.0
    %449 = vmatpush2.xpose.msra.mxu0 0.0
    %450 = vmatprep.subr.mxu0 0.0
    %451 = vmatpush2.xpose.msra.mxu0 0.0
    %452 = vmatprep.subr.mxu0 0.0
    %453 = vmatpush2.xpose.msra.mxu0 0.0
    %454 = vmatprep.subr.mxu0 0.0
    %455 = vmatpush2.xpose.msra.mxu0 0.0
    %456 = vmatprep.subr.mxu0 0.0
    %457 = vmatpush2.xpose.msra.mxu0 0.0
    %458 = vmatprep.subr.mxu0 0.0
    %459 = vmatpush2.xpose.msra.mxu0 0.0
    %460 = vmatprep.subr.mxu0 0.0
    %461 = vmatpush2.xpose.msra.mxu0 0.0
    %462 = vmatprep.subr.mxu0 0.0
    %463 = vmatpush2.xpose.msra.mxu0 0.0
    %464 = vmatprep.subr.mxu0 0.0
    %465 = vmatpush2.xpose.msra.mxu0 0.0
    %466 = vmatprep.mubr.f32.mxu0 0.0
    %467 = vmatmul.mubr.f32.gmra.mxu0 %v397
    %v468 = vpop.f32.mrf.mxu0
    %v469 = vadd.f32 %v389, %v468
    %v470 = vpop.f32.mrf.mxu0
    %471 = vdwg.mxu0
    %v473 = vsel %vm110, %v383, 0
    %v476 = vsel %vm110, %v289, 0
    %478 = vmatprep.subr.mxu0 0.0
    %479 = vmatpush1.xpose.msra.mxu0 0.0
    %480 = vmatprep.subr.mxu0 0.0
    %481 = vmatpush1.xpose.msra.mxu0 0.0
    %482 = vmatprep.subr.mxu0 0.0
    %483 = vmatpush1.xpose.msra.mxu0 0.0
    %484 = vmatprep.subr.mxu0 0.0
    %485 = vmatpush1.xpose.msra.mxu0 0.0
    %486 = vmatprep.subr.mxu0 0.0
    %487 = vmatpush1.xpose.msra.mxu0 0.0
    %488 = vmatprep.subr.mxu0 0.0
    %489 = vmatpush1.xpose.msra.mxu0 0.0
    %490 = vmatprep.subr.mxu0 0.0
    %491 = vmatpush1.xpose.msra.mxu0 0.0
    %492 = vmatprep.subr.mxu0 0.0
    %493 = vmatpush1.xpose.msra.mxu0 0.0
    %494 = vmatprep.subr.mxu0 0.0
    %495 = vmatpush1.xpose.msra.mxu0 0.0
    %496 = vmatprep.subr.mxu0 0.0
    %497 = vmatpush1.xpose.msra.mxu0 0.0
    %498 = vmatprep.subr.mxu0 0.0
    %499 = vmatpush1.xpose.msra.mxu0 0.0
    %500 = vmatprep.subr.mxu0 0.0
    %501 = vmatpush1.xpose.msra.mxu0 0.0
    %502 = vmatprep.subr.mxu0 0.0
    %503 = vmatpush1.xpose.msra.mxu0 0.0
    %504 = vmatprep.subr.mxu0 0.0
    %505 = vmatpush1.xpose.msra.mxu0 0.0
    %506 = vmatprep.subr.mxu0 0.0
    %507 = vmatpush1.xpose.msra.mxu0 0.0
    %508 = vmatprep.subr.mxu0 0.0
    %509 = vmatpush1.xpose.msra.mxu0 %v476
    %510 = vmatprep.subr.mxu0 0.0
    %511 = vmatpush2.xpose.msra.mxu0 0.0
    %512 = vmatprep.subr.mxu0 0.0
    %513 = vmatpush2.xpose.msra.mxu0 0.0
    %514 = vmatprep.subr.mxu0 0.0
    %515 = vmatpush2.xpose.msra.mxu0 0.0
    %516 = vmatprep.subr.mxu0 0.0
    %517 = vmatpush2.xpose.msra.mxu0 0.0
    %518 = vmatprep.subr.mxu0 0.0
    %519 = vmatpush2.xpose.msra.mxu0 0.0
    %520 = vmatprep.subr.mxu0 0.0
    %521 = vmatpush2.xpose.msra.mxu0 0.0
    %522 = vmatprep.subr.mxu0 0.0
    %523 = vmatpush2.xpose.msra.mxu0 0.0
    %524 = vmatprep.subr.mxu0 0.0
    %525 = vmatpush2.xpose.msra.mxu0 0.0
    %526 = vmatprep.subr.mxu0 0.0
    %527 = vmatpush2.xpose.msra.mxu0 0.0
    %528 = vmatprep.subr.mxu0 0.0
    %529 = vmatpush2.xpose.msra.mxu0 0.0
    %530 = vmatprep.subr.mxu0 0.0
    %531 = vmatpush2.xpose.msra.mxu0 0.0
    %532 = vmatprep.subr.mxu0 0.0
    %533 = vmatpush2.xpose.msra.mxu0 0.0
    %534 = vmatprep.subr.mxu0 0.0
    %535 = vmatpush2.xpose.msra.mxu0 0.0
    %536 = vmatprep.subr.mxu0 0.0
    %537 = vmatpush2.xpose.msra.mxu0 0.0
    %538 = vmatprep.subr.mxu0 0.0
    %539 = vmatpush2.xpose.msra.mxu0 0.0
    %540 = vmatprep.subr.mxu0 0.0
    %541 = vmatpush2.xpose.msra.mxu0 0.0
    %542 = vmatprep.mubr.f32.mxu0 0.0
    %543 = vmatmul.mubr.f32.gmra.mxu0 %v473
    %v544 = vpop.f32.mrf.mxu0
    %v545 = vadd.f32 %v393, %v544
    %v546 = vpop.f32.mrf.mxu0
    %547 = vdwg.mxu0
    %vm548 = vcmask 64512
    %v549 = vsel %vm548, %v469, -inf
    %550 = vmax.xlane.f32.xlu0 %v549
    %v551 = vpop.xlane.xlu0 %550
    %v552 = vsel %vm548, %v545, -inf
    %553 = vmax.xlane.f32.xlu0 %v552
    %v554 = vpop.xlane.xlu0 %553
    %v555 = vsub.f32 %v469, %v551
    %v556 = vsub.f32 %v545, %v554
    %v557 = vmul.f32 %v555, 1.442695
    %v558 = vpow.pop %v557
    %v559 = vmul.f32 %v556, 1.442695
    %v560 = vpow.pop %v559
    %v561 = vsel %vm548, %v558, 0.0
    %562 = vadd.xlane.f32.xlu0 %v561
    %v563 = vpop.xlane.xlu0 %562
    %v564 = vsel %vm548, %v560, 0.0
    %565 = vadd.xlane.f32.xlu0 %v564
    %v566 = vpop.xlane.xlu0 %565
    %v567 = vrcp.pop %v563
    %v568 = vrcp.pop %v566
    %v569 = vmul.f32 %v558, %v567
    %v570 = vmul.f32 %v560, %v568
    %v572 = vsel %vm548, %v569, 0
    %574 = vmatprep.subr.mxu0 0.0
    %575 = vmatpush1.msra.mxu0 0.0
    %576 = vmatprep.subr.mxu0 0.0
    %577 = vmatpush1.msra.mxu0 0.0
    %578 = vmatprep.subr.mxu0 0.0
    %579 = vmatpush1.msra.mxu0 0.0
    %580 = vmatprep.subr.mxu0 0.0
    %581 = vmatpush1.msra.mxu0 0.0
    %582 = vmatprep.subr.mxu0 0.0
    %583 = vmatpush1.msra.mxu0 0.0
    %584 = vmatprep.subr.mxu0 0.0
    %585 = vmatpush1.msra.mxu0 0.0
    %586 = vmatprep.subr.mxu0 0.0
    %587 = vmatpush1.msra.mxu0 0.0
    %588 = vmatprep.subr.mxu0 0.0
    %589 = vmatpush1.msra.mxu0 0.0
    %590 = vmatprep.subr.mxu0 0.0
    %591 = vmatpush1.msra.mxu0 0.0
    %592 = vmatprep.subr.mxu0 0.0
    %593 = vmatpush1.msra.mxu0 0.0
    %594 = vmatprep.subr.mxu0 0.0
    %595 = vmatpush1.msra.mxu0 0.0
    %596 = vmatprep.subr.mxu0 0.0
    %597 = vmatpush1.msra.mxu0 0.0
    %598 = vmatprep.subr.mxu0 0.0
    %599 = vmatpush1.msra.mxu0 0.0
    %600 = vmatprep.subr.mxu0 0.0
    %601 = vmatpush1.msra.mxu0 0.0
    %602 = vmatprep.subr.mxu0 0.0
    %603 = vmatpush1.msra.mxu0 0.0
    %604 = vmatprep.subr.mxu0 0.0
    %605 = vmatpush1.msra.mxu0 %v374
    %606 = vmatprep.subr.mxu0 0.0
    %607 = vmatpush2.msra.mxu0 0.0
    %608 = vmatprep.subr.mxu0 0.0
    %609 = vmatpush2.msra.mxu0 0.0
    %610 = vmatprep.subr.mxu0 0.0
    %611 = vmatpush2.msra.mxu0 0.0
    %612 = vmatprep.subr.mxu0 0.0
    %613 = vmatpush2.msra.mxu0 0.0
    %614 = vmatprep.subr.mxu0 0.0
    %615 = vmatpush2.msra.mxu0 0.0
    %616 = vmatprep.subr.mxu0 0.0
    %617 = vmatpush2.msra.mxu0 0.0
    %618 = vmatprep.subr.mxu0 0.0
    %619 = vmatpush2.msra.mxu0 0.0
    %620 = vmatprep.subr.mxu0 0.0
    %621 = vmatpush2.msra.mxu0 0.0
    %622 = vmatprep.subr.mxu0 0.0
    %623 = vmatpush2.msra.mxu0 0.0
    %624 = vmatprep.subr.mxu0 0.0
    %625 = vmatpush2.msra.mxu0 0.0
    %626 = vmatprep.subr.mxu0 0.0
    %627 = vmatpush2.msra.mxu0 0.0
    %628 = vmatprep.subr.mxu0 0.0
    %629 = vmatpush2.msra.mxu0 0.0
    %630 = vmatprep.subr.mxu0 0.0
    %631 = vmatpush2.msra.mxu0 0.0
    %632 = vmatprep.subr.mxu0 0.0
    %633 = vmatpush2.msra.mxu0 0.0
    %634 = vmatprep.subr.mxu0 0.0
    %635 = vmatpush2.msra.mxu0 0.0
    %636 = vmatprep.subr.mxu0 0.0
    %637 = vmatpush2.msra.mxu0 0.0
    %638 = vmatprep.mubr.f32.mxu0 0.0
    %639 = vmatmul.mubr.f32.gmra.mxu0 %v572
    %v640 = vpop.f32.mrf.mxu0
    %v641 = vadd.f32 0.0, %v640
    %v642 = vpop.f32.mrf.mxu0
    %643 = vdwg.mxu0
    %v645 = vsel %vm548, %v570, 0
    %647 = vmatprep.subr.mxu0 0.0
    %648 = vmatpush1.msra.mxu0 0.0
    %649 = vmatprep.subr.mxu0 0.0
    %650 = vmatpush1.msra.mxu0 0.0
    %651 = vmatprep.subr.mxu0 0.0
    %652 = vmatpush1.msra.mxu0 0.0
    %653 = vmatprep.subr.mxu0 0.0
    %654 = vmatpush1.msra.mxu0 0.0
    %655 = vmatprep.subr.mxu0 0.0
    %656 = vmatpush1.msra.mxu0 0.0
    %657 = vmatprep.subr.mxu0 0.0
    %658 = vmatpush1.msra.mxu0 0.0
    %659 = vmatprep.subr.mxu0 0.0
    %660 = vmatpush1.msra.mxu0 0.0
    %661 = vmatprep.subr.mxu0 0.0
    %662 = vmatpush1.msra.mxu0 0.0
    %663 = vmatprep.subr.mxu0 0.0
    %664 = vmatpush1.msra.mxu0 0.0
    %665 = vmatprep.subr.mxu0 0.0
    %666 = vmatpush1.msra.mxu0 0.0
    %667 = vmatprep.subr.mxu0 0.0
    %668 = vmatpush1.msra.mxu0 0.0
    %669 = vmatprep.subr.mxu0 0.0
    %670 = vmatpush1.msra.mxu0 0.0
    %671 = vmatprep.subr.mxu0 0.0
    %672 = vmatpush1.msra.mxu0 0.0
    %673 = vmatprep.subr.mxu0 0.0
    %674 = vmatpush1.msra.mxu0 0.0
    %675 = vmatprep.subr.mxu0 0.0
    %676 = vmatpush1.msra.mxu0 0.0
    %677 = vmatprep.subr.mxu0 0.0
    %678 = vmatpush1.msra.mxu0 %v375
    %679 = vmatprep.subr.mxu0 0.0
    %680 = vmatpush2.msra.mxu0 0.0
    %681 = vmatprep.subr.mxu0 0.0
    %682 = vmatpush2.msra.mxu0 0.0
    %683 = vmatprep.subr.mxu0 0.0
    %684 = vmatpush2.msra.mxu0 0.0
    %685 = vmatprep.subr.mxu0 0.0
    %686 = vmatpush2.msra.mxu0 0.0
    %687 = vmatprep.subr.mxu0 0.0
    %688 = vmatpush2.msra.mxu0 0.0
    %689 = vmatprep.subr.mxu0 0.0
    %690 = vmatpush2.msra.mxu0 0.0
    %691 = vmatprep.subr.mxu0 0.0
    %692 = vmatpush2.msra.mxu0 0.0
    %693 = vmatprep.subr.mxu0 0.0
    %694 = vmatpush2.msra.mxu0 0.0
    %695 = vmatprep.subr.mxu0 0.0
    %696 = vmatpush2.msra.mxu0 0.0
    %697 = vmatprep.subr.mxu0 0.0
    %698 = vmatpush2.msra.mxu0 0.0
    %699 = vmatprep.subr.mxu0 0.0
    %700 = vmatpush2.msra.mxu0 0.0
    %701 = vmatprep.subr.mxu0 0.0
    %702 = vmatpush2.msra.mxu0 0.0
    %703 = vmatprep.subr.mxu0 0.0
    %704 = vmatpush2.msra.mxu0 0.0
    %705 = vmatprep.subr.mxu0 0.0
    %706 = vmatpush2.msra.mxu0 0.0
    %707 = vmatprep.subr.mxu0 0.0
    %708 = vmatpush2.msra.mxu0 0.0
    %709 = vmatprep.subr.mxu0 0.0
    %710 = vmatpush2.msra.mxu0 0.0
    %711 = vmatprep.mubr.f32.mxu0 0.0
    %712 = vmatmul.mubr.f32.gmra.mxu0 %v645
    %v713 = vpop.f32.mrf.mxu0
    %v714 = vadd.f32 0.0, %v713
    %v715 = vpop.f32.mrf.mxu0
    %716 = vdwg.mxu0
    %v717 = vmul.f32 %v641, %v381
    %v718 = vmul.f32 %v714, %v381
    %v719 = vlaneseq
    %v720 = vshrl.u32 %v719, 7
    %v721 = vsub.s32 0, %v720
    %v722 = vrot.slane %v37, %v721
    %v723 = vmul.f32 %v196, %v722
    %v724 = vmul.f32 %v197, %v722
    %v726 = vsel %vm110, %v723, 0
    %728 = vmatprep.subr.mxu0 0.0
    %729 = vmatpush1.xpose.msra.mxu0 0.0
    %730 = vmatprep.subr.mxu0 0.0
    %731 = vmatpush1.xpose.msra.mxu0 0.0
    %732 = vmatprep.subr.mxu0 0.0
    %733 = vmatpush1.xpose.msra.mxu0 0.0
    %734 = vmatprep.subr.mxu0 0.0
    %735 = vmatpush1.xpose.msra.mxu0 0.0
    %736 = vmatprep.subr.mxu0 0.0
    %737 = vmatpush1.xpose.msra.mxu0 0.0
    %738 = vmatprep.subr.mxu0 0.0
    %739 = vmatpush1.xpose.msra.mxu0 0.0
    %740 = vmatprep.subr.mxu0 0.0
    %741 = vmatpush1.xpose.msra.mxu0 0.0
    %742 = vmatprep.subr.mxu0 0.0
    %743 = vmatpush1.xpose.msra.mxu0 0.0
    %744 = vmatprep.subr.mxu0 0.0
    %745 = vmatpush1.xpose.msra.mxu0 0.0
    %746 = vmatprep.subr.mxu0 0.0
    %747 = vmatpush1.xpose.msra.mxu0 0.0
    %748 = vmatprep.subr.mxu0 0.0
    %749 = vmatpush1.xpose.msra.mxu0 0.0
    %750 = vmatprep.subr.mxu0 0.0
    %751 = vmatpush1.xpose.msra.mxu0 0.0
    %752 = vmatprep.subr.mxu0 0.0
    %753 = vmatpush1.xpose.msra.mxu0 0.0
    %754 = vmatprep.subr.mxu0 0.0
    %755 = vmatpush1.xpose.msra.mxu0 0.0
    %756 = vmatprep.subr.mxu0 0.0
    %757 = vmatpush1.xpose.msra.mxu0 0.0
    %758 = vmatprep.subr.mxu0 0.0
    %759 = vmatpush1.xpose.msra.mxu0 %v400
    %760 = vmatprep.subr.mxu0 0.0
    %761 = vmatpush2.xpose.msra.mxu0 0.0
    %762 = vmatprep.subr.mxu0 0.0
    %763 = vmatpush2.xpose.msra.mxu0 0.0
    %764 = vmatprep.subr.mxu0 0.0
    %765 = vmatpush2.xpose.msra.mxu0 0.0
    %766 = vmatprep.subr.mxu0 0.0
    %767 = vmatpush2.xpose.msra.mxu0 0.0
    %768 = vmatprep.subr.mxu0 0.0
    %769 = vmatpush2.xpose.msra.mxu0 0.0
    %770 = vmatprep.subr.mxu0 0.0
    %771 = vmatpush2.xpose.msra.mxu0 0.0
    %772 = vmatprep.subr.mxu0 0.0
    %773 = vmatpush2.xpose.msra.mxu0 0.0
    %774 = vmatprep.subr.mxu0 0.0
    %775 = vmatpush2.xpose.msra.mxu0 0.0
    %776 = vmatprep.subr.mxu0 0.0
    %777 = vmatpush2.xpose.msra.mxu0 0.0
    %778 = vmatprep.subr.mxu0 0.0
    %779 = vmatpush2.xpose.msra.mxu0 0.0
    %780 = vmatprep.subr.mxu0 0.0
    %781 = vmatpush2.xpose.msra.mxu0 0.0
    %782 = vmatprep.subr.mxu0 0.0
    %783 = vmatpush2.xpose.msra.mxu0 0.0
    %784 = vmatprep.subr.mxu0 0.0
    %785 = vmatpush2.xpose.msra.mxu0 0.0
    %786 = vmatprep.subr.mxu0 0.0
    %787 = vmatpush2.xpose.msra.mxu0 0.0
    %788 = vmatprep.subr.mxu0 0.0
    %789 = vmatpush2.xpose.msra.mxu0 0.0
    %790 = vmatprep.subr.mxu0 0.0
    %791 = vmatpush2.xpose.msra.mxu0 0.0
    %792 = vmatprep.mubr.f32.mxu0 0.0
    %793 = vmatmul.mubr.f32.gmra.mxu0 %v726
    %v794 = vpop.f32.mrf.mxu0
    %v795 = vadd.f32 %v389, %v794
    %v796 = vpop.f32.mrf.mxu0
    %797 = vdwg.mxu0
    %v799 = vsel %vm110, %v724, 0
    %801 = vmatprep.subr.mxu0 0.0
    %802 = vmatpush1.xpose.msra.mxu0 0.0
    %803 = vmatprep.subr.mxu0 0.0
    %804 = vmatpush1.xpose.msra.mxu0 0.0
    %805 = vmatprep.subr.mxu0 0.0
    %806 = vmatpush1.xpose.msra.mxu0 0.0
    %807 = vmatprep.subr.mxu0 0.0
    %808 = vmatpush1.xpose.msra.mxu0 0.0
    %809 = vmatprep.subr.mxu0 0.0
    %810 = vmatpush1.xpose.msra.mxu0 0.0
    %811 = vmatprep.subr.mxu0 0.0
    %812 = vmatpush1.xpose.msra.mxu0 0.0
    %813 = vmatprep.subr.mxu0 0.0
    %814 = vmatpush1.xpose.msra.mxu0 0.0
    %815 = vmatprep.subr.mxu0 0.0
    %816 = vmatpush1.xpose.msra.mxu0 0.0
    %817 = vmatprep.subr.mxu0 0.0
    %818 = vmatpush1.xpose.msra.mxu0 0.0
    %819 = vmatprep.subr.mxu0 0.0
    %820 = vmatpush1.xpose.msra.mxu0 0.0
    %821 = vmatprep.subr.mxu0 0.0
    %822 = vmatpush1.xpose.msra.mxu0 0.0
    %823 = vmatprep.subr.mxu0 0.0
    %824 = vmatpush1.xpose.msra.mxu0 0.0
    %825 = vmatprep.subr.mxu0 0.0
    %826 = vmatpush1.xpose.msra.mxu0 0.0
    %827 = vmatprep.subr.mxu0 0.0
    %828 = vmatpush1.xpose.msra.mxu0 0.0
    %829 = vmatprep.subr.mxu0 0.0
    %830 = vmatpush1.xpose.msra.mxu0 0.0
    %831 = vmatprep.subr.mxu0 0.0
    %832 = vmatpush1.xpose.msra.mxu0 %v476
    %833 = vmatprep.subr.mxu0 0.0
    %834 = vmatpush2.xpose.msra.mxu0 0.0
    %835 = vmatprep.subr.mxu0 0.0
    %836 = vmatpush2.xpose.msra.mxu0 0.0
    %837 = vmatprep.subr.mxu0 0.0
    %838 = vmatpush2.xpose.msra.mxu0 0.0
    %839 = vmatprep.subr.mxu0 0.0
    %840 = vmatpush2.xpose.msra.mxu0 0.0
    %841 = vmatprep.subr.mxu0 0.0
    %842 = vmatpush2.xpose.msra.mxu0 0.0
    %843 = vmatprep.subr.mxu0 0.0
    %844 = vmatpush2.xpose.msra.mxu0 0.0
    %845 = vmatprep.subr.mxu0 0.0
    %846 = vmatpush2.xpose.msra.mxu0 0.0
    %847 = vmatprep.subr.mxu0 0.0
    %848 = vmatpush2.xpose.msra.mxu0 0.0
    %849 = vmatprep.subr.mxu0 0.0
    %850 = vmatpush2.xpose.msra.mxu0 0.0
    %851 = vmatprep.subr.mxu0 0.0
    %852 = vmatpush2.xpose.msra.mxu0 0.0
    %853 = vmatprep.subr.mxu0 0.0
    %854 = vmatpush2.xpose.msra.mxu0 0.0
    %855 = vmatprep.subr.mxu0 0.0
    %856 = vmatpush2.xpose.msra.mxu0 0.0
    %857 = vmatprep.subr.mxu0 0.0
    %858 = vmatpush2.xpose.msra.mxu0 0.0
    %859 = vmatprep.subr.mxu0 0.0
    %860 = vmatpush2.xpose.msra.mxu0 0.0
    %861 = vmatprep.subr.mxu0 0.0
    %862 = vmatpush2.xpose.msra.mxu0 0.0
    %863 = vmatprep.subr.mxu0 0.0
    %864 = vmatpush2.xpose.msra.mxu0 0.0
    %865 = vmatprep.mubr.f32.mxu0 0.0
    %866 = vmatmul.mubr.f32.gmra.mxu0 %v799
    %v867 = vpop.f32.mrf.mxu0
    %v868 = vadd.f32 %v393, %v867
    %v869 = vpop.f32.mrf.mxu0
    %870 = vdwg.mxu0
    %v871 = vsel %vm548, %v795, -inf
    %872 = vmax.xlane.f32.xlu0 %v871
    %v873 = vpop.xlane.xlu0 %872
    %v874 = vsel %vm548, %v868, -inf
    %875 = vmax.xlane.f32.xlu0 %v874
    %v876 = vpop.xlane.xlu0 %875
    %v877 = vsub.f32 %v795, %v873
    %v878 = vsub.f32 %v868, %v876
    %v879 = vmul.f32 %v877, 1.442695
    %v880 = vpow.pop %v879
    %v881 = vmul.f32 %v878, 1.442695
    %v882 = vpow.pop %v881
    %v883 = vsel %vm548, %v880, 0.0
    %884 = vadd.xlane.f32.xlu0 %v883
    %v885 = vpop.xlane.xlu0 %884
    %v886 = vsel %vm548, %v882, 0.0
    %887 = vadd.xlane.f32.xlu0 %v886
    %v888 = vpop.xlane.xlu0 %887
    %v889 = vrcp.pop %v885
    %v890 = vrcp.pop %v888
    %v891 = vmul.f32 %v880, %v889
    %v892 = vmul.f32 %v882, %v890
    %v894 = vsel %vm548, %v891, 0
    %896 = vmatprep.subr.mxu0 0.0
    %897 = vmatpush1.msra.mxu0 0.0
    %898 = vmatprep.subr.mxu0 0.0
    %899 = vmatpush1.msra.mxu0 0.0
    %900 = vmatprep.subr.mxu0 0.0
    %901 = vmatpush1.msra.mxu0 0.0
    %902 = vmatprep.subr.mxu0 0.0
    %903 = vmatpush1.msra.mxu0 0.0
    %904 = vmatprep.subr.mxu0 0.0
    %905 = vmatpush1.msra.mxu0 0.0
    %906 = vmatprep.subr.mxu0 0.0
    %907 = vmatpush1.msra.mxu0 0.0
    %908 = vmatprep.subr.mxu0 0.0
    %909 = vmatpush1.msra.mxu0 0.0
    %910 = vmatprep.subr.mxu0 0.0
    %911 = vmatpush1.msra.mxu0 0.0
    %912 = vmatprep.subr.mxu0 0.0
    %913 = vmatpush1.msra.mxu0 0.0
    %914 = vmatprep.subr.mxu0 0.0
    %915 = vmatpush1.msra.mxu0 0.0
    %916 = vmatprep.subr.mxu0 0.0
    %917 = vmatpush1.msra.mxu0 0.0
    %918 = vmatprep.subr.mxu0 0.0
    %919 = vmatpush1.msra.mxu0 0.0
    %920 = vmatprep.subr.mxu0 0.0
    %921 = vmatpush1.msra.mxu0 0.0
    %922 = vmatprep.subr.mxu0 0.0
    %923 = vmatpush1.msra.mxu0 0.0
    %924 = vmatprep.subr.mxu0 0.0
    %925 = vmatpush1.msra.mxu0 0.0
    %926 = vmatprep.subr.mxu0 0.0
    %927 = vmatpush1.msra.mxu0 %v374
    %928 = vmatprep.subr.mxu0 0.0
    %929 = vmatpush2.msra.mxu0 0.0
    %930 = vmatprep.subr.mxu0 0.0
    %931 = vmatpush2.msra.mxu0 0.0
    %932 = vmatprep.subr.mxu0 0.0
    %933 = vmatpush2.msra.mxu0 0.0
    %934 = vmatprep.subr.mxu0 0.0
    %935 = vmatpush2.msra.mxu0 0.0
    %936 = vmatprep.subr.mxu0 0.0
    %937 = vmatpush2.msra.mxu0 0.0
    %938 = vmatprep.subr.mxu0 0.0
    %939 = vmatpush2.msra.mxu0 0.0
    %940 = vmatprep.subr.mxu0 0.0
    %941 = vmatpush2.msra.mxu0 0.0
    %942 = vmatprep.subr.mxu0 0.0
    %943 = vmatpush2.msra.mxu0 0.0
    %944 = vmatprep.subr.mxu0 0.0
    %945 = vmatpush2.msra.mxu0 0.0
    %946 = vmatprep.subr.mxu0 0.0
    %947 = vmatpush2.msra.mxu0 0.0
    %948 = vmatprep.subr.mxu0 0.0
    %949 = vmatpush2.msra.mxu0 0.0
    %950 = vmatprep.subr.mxu0 0.0
    %951 = vmatpush2.msra.mxu0 0.0
    %952 = vmatprep.subr.mxu0 0.0
    %953 = vmatpush2.msra.mxu0 0.0
    %954 = vmatprep.subr.mxu0 0.0
    %955 = vmatpush2.msra.mxu0 0.0
    %956 = vmatprep.subr.mxu0 0.0
    %957 = vmatpush2.msra.mxu0 0.0
    %958 = vmatprep.subr.mxu0 0.0
    %959 = vmatpush2.msra.mxu0 0.0
    %960 = vmatprep.mubr.f32.mxu0 0.0
    %961 = vmatmul.mubr.f32.gmra.mxu0 %v894
    %v962 = vpop.f32.mrf.mxu0
    %v963 = vadd.f32 0.0, %v962
    %v964 = vpop.f32.mrf.mxu0
    %965 = vdwg.mxu0
    %v967 = vsel %vm548, %v892, 0
    %969 = vmatprep.subr.mxu0 0.0
    %970 = vmatpush1.msra.mxu0 0.0
    %971 = vmatprep.subr.mxu0 0.0
    %972 = vmatpush1.msra.mxu0 0.0
    %973 = vmatprep.subr.mxu0 0.0
    %974 = vmatpush1.msra.mxu0 0.0
    %975 = vmatprep.subr.mxu0 0.0
    %976 = vmatpush1.msra.mxu0 0.0
    %977 = vmatprep.subr.mxu0 0.0
    %978 = vmatpush1.msra.mxu0 0.0
    %979 = vmatprep.subr.mxu0 0.0
    %980 = vmatpush1.msra.mxu0 0.0
    %981 = vmatprep.subr.mxu0 0.0
    %982 = vmatpush1.msra.mxu0 0.0
    %983 = vmatprep.subr.mxu0 0.0
    %984 = vmatpush1.msra.mxu0 0.0
    %985 = vmatprep.subr.mxu0 0.0
    %986 = vmatpush1.msra.mxu0 0.0
    %987 = vmatprep.subr.mxu0 0.0
    %988 = vmatpush1.msra.mxu0 0.0
    %989 = vmatprep.subr.mxu0 0.0
    %990 = vmatpush1.msra.mxu0 0.0
    %991 = vmatprep.subr.mxu0 0.0
    %992 = vmatpush1.msra.mxu0 0.0
    %993 = vmatprep.subr.mxu0 0.0
    %994 = vmatpush1.msra.mxu0 0.0
    %995 = vmatprep.subr.mxu0 0.0
    %996 = vmatpush1.msra.mxu0 0.0
    %997 = vmatprep.subr.mxu0 0.0
    %998 = vmatpush1.msra.mxu0 0.0
    %999 = vmatprep.subr.mxu0 0.0
    %1000 = vmatpush1.msra.mxu0 %v375
    %1001 = vmatprep.subr.mxu0 0.0
    %1002 = vmatpush2.msra.mxu0 0.0
    %1003 = vmatprep.subr.mxu0 0.0
    %1004 = vmatpush2.msra.mxu0 0.0
    %1005 = vmatprep.subr.mxu0 0.0
    %1006 = vmatpush2.msra.mxu0 0.0
    %1007 = vmatprep.subr.mxu0 0.0
    %1008 = vmatpush2.msra.mxu0 0.0
    %1009 = vmatprep.subr.mxu0 0.0
    %1010 = vmatpush2.msra.mxu0 0.0
    %1011 = vmatprep.subr.mxu0 0.0
    %1012 = vmatpush2.msra.mxu0 0.0
    %1013 = vmatprep.subr.mxu0 0.0
    %1014 = vmatpush2.msra.mxu0 0.0
    %1015 = vmatprep.subr.mxu0 0.0
    %1016 = vmatpush2.msra.mxu0 0.0
    %1017 = vmatprep.subr.mxu0 0.0
    %1018 = vmatpush2.msra.mxu0 0.0
    %1019 = vmatprep.subr.mxu0 0.0
    %1020 = vmatpush2.msra.mxu0 0.0
    %1021 = vmatprep.subr.mxu0 0.0
    %1022 = vmatpush2.msra.mxu0 0.0
    %1023 = vmatprep.subr.mxu0 0.0
    %1024 = vmatpush2.msra.mxu0 0.0
    %1025 = vmatprep.subr.mxu0 0.0
    %1026 = vmatpush2.msra.mxu0 0.0
    %1027 = vmatprep.subr.mxu0 0.0
    %1028 = vmatpush2.msra.mxu0 0.0
    %1029 = vmatprep.subr.mxu0 0.0
    %1030 = vmatpush2.msra.mxu0 0.0
    %1031 = vmatprep.subr.mxu0 0.0
    %1032 = vmatpush2.msra.mxu0 0.0
    %1033 = vmatprep.mubr.f32.mxu0 0.0
    %1034 = vmatmul.mubr.f32.gmra.mxu0 %v967
    %v1035 = vpop.f32.mrf.mxu0
    %v1036 = vadd.f32 0.0, %v1035
    %v1037 = vpop.f32.mrf.mxu0
    %1038 = vdwg.mxu0
    %v1039 = vmul.f32 %v963, %v722
    %v1040 = vmul.f32 %v1036, %v722
    %v1041 = vadd.f32 %v717, %v1039
    %v1042 = vadd.f32 %v718, %v1040
    %v1043 = vlaneseq
    %v1044 = vshrl.u32 %v1043, 7
    %v1045 = vsub.s32 1, %v1044
    %v1046 = vrot.slane %v37, %v1045
    %v1047 = vmul.f32 %v196, %v1046
    %v1048 = vmul.f32 %v197, %v1046
    %v1050 = vsel %vm110, %v1047, 0
    %1052 = vmatprep.subr.mxu0 0.0
    %1053 = vmatpush1.xpose.msra.mxu0 0.0
    %1054 = vmatprep.subr.mxu0 0.0
    %1055 = vmatpush1.xpose.msra.mxu0 0.0
    %1056 = vmatprep.subr.mxu0 0.0
    %1057 = vmatpush1.xpose.msra.mxu0 0.0
    %1058 = vmatprep.subr.mxu0 0.0
    %1059 = vmatpush1.xpose.msra.mxu0 0.0
    %1060 = vmatprep.subr.mxu0 0.0
    %1061 = vmatpush1.xpose.msra.mxu0 0.0
    %1062 = vmatprep.subr.mxu0 0.0
    %1063 = vmatpush1.xpose.msra.mxu0 0.0
    %1064 = vmatprep.subr.mxu0 0.0
    %1065 = vmatpush1.xpose.msra.mxu0 0.0
    %1066 = vmatprep.subr.mxu0 0.0
    %1067 = vmatpush1.xpose.msra.mxu0 0.0
    %1068 = vmatprep.subr.mxu0 0.0
    %1069 = vmatpush1.xpose.msra.mxu0 0.0
    %1070 = vmatprep.subr.mxu0 0.0
    %1071 = vmatpush1.xpose.msra.mxu0 0.0
    %1072 = vmatprep.subr.mxu0 0.0
    %1073 = vmatpush1.xpose.msra.mxu0 0.0
    %1074 = vmatprep.subr.mxu0 0.0
    %1075 = vmatpush1.xpose.msra.mxu0 0.0
    %1076 = vmatprep.subr.mxu0 0.0
    %1077 = vmatpush1.xpose.msra.mxu0 0.0
    %1078 = vmatprep.subr.mxu0 0.0
    %1079 = vmatpush1.xpose.msra.mxu0 0.0
    %1080 = vmatprep.subr.mxu0 0.0
    %1081 = vmatpush1.xpose.msra.mxu0 0.0
    %1082 = vmatprep.subr.mxu0 0.0
    %1083 = vmatpush1.xpose.msra.mxu0 %v400
    %1084 = vmatprep.subr.mxu0 0.0
    %1085 = vmatpush2.xpose.msra.mxu0 0.0
    %1086 = vmatprep.subr.mxu0 0.0
    %1087 = vmatpush2.xpose.msra.mxu0 0.0
    %1088 = vmatprep.subr.mxu0 0.0
    %1089 = vmatpush2.xpose.msra.mxu0 0.0
    %1090 = vmatprep.subr.mxu0 0.0
    %1091 = vmatpush2.xpose.msra.mxu0 0.0
    %1092 = vmatprep.subr.mxu0 0.0
    %1093 = vmatpush2.xpose.msra.mxu0 0.0
    %1094 = vmatprep.subr.mxu0 0.0
    %1095 = vmatpush2.xpose.msra.mxu0 0.0
    %1096 = vmatprep.subr.mxu0 0.0
    %1097 = vmatpush2.xpose.msra.mxu0 0.0
    %1098 = vmatprep.subr.mxu0 0.0
    %1099 = vmatpush2.xpose.msra.mxu0 0.0
    %1100 = vmatprep.subr.mxu0 0.0
    %1101 = vmatpush2.xpose.msra.mxu0 0.0
    %1102 = vmatprep.subr.mxu0 0.0
    %1103 = vmatpush2.xpose.msra.mxu0 0.0
    %1104 = vmatprep.subr.mxu0 0.0
    %1105 = vmatpush2.xpose.msra.mxu0 0.0
    %1106 = vmatprep.subr.mxu0 0.0
    %1107 = vmatpush2.xpose.msra.mxu0 0.0
    %1108 = vmatprep.subr.mxu0 0.0
    %1109 = vmatpush2.xpose.msra.mxu0 0.0
    %1110 = vmatprep.subr.mxu0 0.0
    %1111 = vmatpush2.xpose.msra.mxu0 0.0
    %1112 = vmatprep.subr.mxu0 0.0
    %1113 = vmatpush2.xpose.msra.mxu0 0.0
    %1114 = vmatprep.subr.mxu0 0.0
    %1115 = vmatpush2.xpose.msra.mxu0 0.0
    %1116 = vmatprep.mubr.f32.mxu0 0.0
    %1117 = vmatmul.mubr.f32.gmra.mxu0 %v1050
    %v1118 = vpop.f32.mrf.mxu0
    %v1119 = vadd.f32 %v389, %v1118
    %v1120 = vpop.f32.mrf.mxu0
    %1121 = vdwg.mxu0
    %v1123 = vsel %vm110, %v1048, 0
    %1125 = vmatprep.subr.mxu0 0.0
    %1126 = vmatpush1.xpose.msra.mxu0 0.0
    %1127 = vmatprep.subr.mxu0 0.0
    %1128 = vmatpush1.xpose.msra.mxu0 0.0
    %1129 = vmatprep.subr.mxu0 0.0
    %1130 = vmatpush1.xpose.msra.mxu0 0.0
    %1131 = vmatprep.subr.mxu0 0.0
    %1132 = vmatpush1.xpose.msra.mxu0 0.0
    %1133 = vmatprep.subr.mxu0 0.0
    %1134 = vmatpush1.xpose.msra.mxu0 0.0
    %1135 = vmatprep.subr.mxu0 0.0
    %1136 = vmatpush1.xpose.msra.mxu0 0.0
    %1137 = vmatprep.subr.mxu0 0.0
    %1138 = vmatpush1.xpose.msra.mxu0 0.0
    %1139 = vmatprep.subr.mxu0 0.0
    %1140 = vmatpush1.xpose.msra.mxu0 0.0
    %1141 = vmatprep.subr.mxu0 0.0
    %1142 = vmatpush1.xpose.msra.mxu0 0.0
    %1143 = vmatprep.subr.mxu0 0.0
    %1144 = vmatpush1.xpose.msra.mxu0 0.0
    %1145 = vmatprep.subr.mxu0 0.0
    %1146 = vmatpush1.xpose.msra.mxu0 0.0
    %1147 = vmatprep.subr.mxu0 0.0
    %1148 = vmatpush1.xpose.msra.mxu0 0.0
    %1149 = vmatprep.subr.mxu0 0.0
    %1150 = vmatpush1.xpose.msra.mxu0 0.0
    %1151 = vmatprep.subr.mxu0 0.0
    %1152 = vmatpush1.xpose.msra.mxu0 0.0
    %1153 = vmatprep.subr.mxu0 0.0
    %1154 = vmatpush1.xpose.msra.mxu0 0.0
    %1155 = vmatprep.subr.mxu0 0.0
    %1156 = vmatpush1.xpose.msra.mxu0 %v476
    %1157 = vmatprep.subr.mxu0 0.0
    %1158 = vmatpush2.xpose.msra.mxu0 0.0
    %1159 = vmatprep.subr.mxu0 0.0
    %1160 = vmatpush2.xpose.msra.mxu0 0.0
    %1161 = vmatprep.subr.mxu0 0.0
    %1162 = vmatpush2.xpose.msra.mxu0 0.0
    %1163 = vmatprep.subr.mxu0 0.0
    %1164 = vmatpush2.xpose.msra.mxu0 0.0
    %1165 = vmatprep.subr.mxu0 0.0
    %1166 = vmatpush2.xpose.msra.mxu0 0.0
    %1167 = vmatprep.subr.mxu0 0.0
    %1168 = vmatpush2.xpose.msra.mxu0 0.0
    %1169 = vmatprep.subr.mxu0 0.0
    %1170 = vmatpush2.xpose.msra.mxu0 0.0
    %1171 = vmatprep.subr.mxu0 0.0
    %1172 = vmatpush2.xpose.msra.mxu0 0.0
    %1173 = vmatprep.subr.mxu0 0.0
    %1174 = vmatpush2.xpose.msra.mxu0 0.0
    %1175 = vmatprep.subr.mxu0 0.0
    %1176 = vmatpush2.xpose.msra.mxu0 0.0
    %1177 = vmatprep.subr.mxu0 0.0
    %1178 = vmatpush2.xpose.msra.mxu0 0.0
    %1179 = vmatprep.subr.mxu0 0.0
    %1180 = vmatpush2.xpose.msra.mxu0 0.0
    %1181 = vmatprep.subr.mxu0 0.0
    %1182 = vmatpush2.xpose.msra.mxu0 0.0
    %1183 = vmatprep.subr.mxu0 0.0
    %1184 = vmatpush2.xpose.msra.mxu0 0.0
    %1185 = vmatprep.subr.mxu0 0.0
    %1186 = vmatpush2.xpose.msra.mxu0 0.0
    %1187 = vmatprep.subr.mxu0 0.0
    %1188 = vmatpush2.xpose.msra.mxu0 0.0
    %1189 = vmatprep.mubr.f32.mxu0 0.0
    %1190 = vmatmul.mubr.f32.gmra.mxu0 %v1123
    %v1191 = vpop.f32.mrf.mxu0
    %v1192 = vadd.f32 %v393, %v1191
    %v1193 = vpop.f32.mrf.mxu0
    %1194 = vdwg.mxu0
    %v1195 = vsel %vm548, %v1119, -inf
    %1196 = vmax.xlane.f32.xlu0 %v1195
    %v1197 = vpop.xlane.xlu0 %1196
    %v1198 = vsel %vm548, %v1192, -inf
    %1199 = vmax.xlane.f32.xlu0 %v1198
    %v1200 = vpop.xlane.xlu0 %1199
    %v1201 = vsub.f32 %v1119, %v1197
    %v1202 = vsub.f32 %v1192, %v1200
    %v1203 = vmul.f32 %v1201, 1.442695
    %v1204 = vpow.pop %v1203
    %v1205 = vmul.f32 %v1202, 1.442695
    %v1206 = vpow.pop %v1205
    %v1207 = vsel %vm548, %v1204, 0.0
    %1208 = vadd.xlane.f32.xlu0 %v1207
    %v1209 = vpop.xlane.xlu0 %1208
    %v1210 = vsel %vm548, %v1206, 0.0
    %1211 = vadd.xlane.f32.xlu0 %v1210
    %v1212 = vpop.xlane.xlu0 %1211
    %v1213 = vrcp.pop %v1209
    %v1214 = vrcp.pop %v1212
    %v1215 = vmul.f32 %v1204, %v1213
    %v1216 = vmul.f32 %v1206, %v1214
    %v1218 = vsel %vm548, %v1215, 0
    %1220 = vmatprep.subr.mxu0 0.0
    %1221 = vmatpush1.msra.mxu0 0.0
    %1222 = vmatprep.subr.mxu0 0.0
    %1223 = vmatpush1.msra.mxu0 0.0
    %1224 = vmatprep.subr.mxu0 0.0
    %1225 = vmatpush1.msra.mxu0 0.0
    %1226 = vmatprep.subr.mxu0 0.0
    %1227 = vmatpush1.msra.mxu0 0.0
    %1228 = vmatprep.subr.mxu0 0.0
    %1229 = vmatpush1.msra.mxu0 0.0
    %1230 = vmatprep.subr.mxu0 0.0
    %1231 = vmatpush1.msra.mxu0 0.0
    %1232 = vmatprep.subr.mxu0 0.0
    %1233 = vmatpush1.msra.mxu0 0.0
    %1234 = vmatprep.subr.mxu0 0.0
    %1235 = vmatpush1.msra.mxu0 0.0
    %1236 = vmatprep.subr.mxu0 0.0
    %1237 = vmatpush1.msra.mxu0 0.0
    %1238 = vmatprep.subr.mxu0 0.0
    %1239 = vmatpush1.msra.mxu0 0.0
    %1240 = vmatprep.subr.mxu0 0.0
    %1241 = vmatpush1.msra.mxu0 0.0
    %1242 = vmatprep.subr.mxu0 0.0
    %1243 = vmatpush1.msra.mxu0 0.0
    %1244 = vmatprep.subr.mxu0 0.0
    %1245 = vmatpush1.msra.mxu0 0.0
    %1246 = vmatprep.subr.mxu0 0.0
    %1247 = vmatpush1.msra.mxu0 0.0
    %1248 = vmatprep.subr.mxu0 0.0
    %1249 = vmatpush1.msra.mxu0 0.0
    %1250 = vmatprep.subr.mxu0 0.0
    %1251 = vmatpush1.msra.mxu0 %v374
    %1252 = vmatprep.subr.mxu0 0.0
    %1253 = vmatpush2.msra.mxu0 0.0
    %1254 = vmatprep.subr.mxu0 0.0
    %1255 = vmatpush2.msra.mxu0 0.0
    %1256 = vmatprep.subr.mxu0 0.0
    %1257 = vmatpush2.msra.mxu0 0.0
    %1258 = vmatprep.subr.mxu0 0.0
    %1259 = vmatpush2.msra.mxu0 0.0
    %1260 = vmatprep.subr.mxu0 0.0
    %1261 = vmatpush2.msra.mxu0 0.0
    %1262 = vmatprep.subr.mxu0 0.0
    %1263 = vmatpush2.msra.mxu0 0.0
    %1264 = vmatprep.subr.mxu0 0.0
    %1265 = vmatpush2.msra.mxu0 0.0
    %1266 = vmatprep.subr.mxu0 0.0
    %1267 = vmatpush2.msra.mxu0 0.0
    %1268 = vmatprep.subr.mxu0 0.0
    %1269 = vmatpush2.msra.mxu0 0.0
    %1270 = vmatprep.subr.mxu0 0.0
    %1271 = vmatpush2.msra.mxu0 0.0
    %1272 = vmatprep.subr.mxu0 0.0
    %1273 = vmatpush2.msra.mxu0 0.0
    %1274 = vmatprep.subr.mxu0 0.0
    %1275 = vmatpush2.msra.mxu0 0.0
    %1276 = vmatprep.subr.mxu0 0.0
    %1277 = vmatpush2.msra.mxu0 0.0
    %1278 = vmatprep.subr.mxu0 0.0
    %1279 = vmatpush2.msra.mxu0 0.0
    %1280 = vmatprep.subr.mxu0 0.0
    %1281 = vmatpush2.msra.mxu0 0.0
    %1282 = vmatprep.subr.mxu0 0.0
    %1283 = vmatpush2.msra.mxu0 0.0
    %1284 = vmatprep.mubr.f32.mxu0 0.0
    %1285 = vmatmul.mubr.f32.gmra.mxu0 %v1218
    %v1286 = vpop.f32.mrf.mxu0
    %v1287 = vadd.f32 0.0, %v1286
    %v1288 = vpop.f32.mrf.mxu0
    %1289 = vdwg.mxu0
    %v1291 = vsel %vm548, %v1216, 0
    %1293 = vmatprep.subr.mxu0 0.0
    %1294 = vmatpush1.msra.mxu0 0.0
    %1295 = vmatprep.subr.mxu0 0.0
    %1296 = vmatpush1.msra.mxu0 0.0
    %1297 = vmatprep.subr.mxu0 0.0
    %1298 = vmatpush1.msra.mxu0 0.0
    %1299 = vmatprep.subr.mxu0 0.0
    %1300 = vmatpush1.msra.mxu0 0.0
    %1301 = vmatprep.subr.mxu0 0.0
    %1302 = vmatpush1.msra.mxu0 0.0
    %1303 = vmatprep.subr.mxu0 0.0
    %1304 = vmatpush1.msra.mxu0 0.0
    %1305 = vmatprep.subr.mxu0 0.0
    %1306 = vmatpush1.msra.mxu0 0.0
    %1307 = vmatprep.subr.mxu0 0.0
    %1308 = vmatpush1.msra.mxu0 0.0
    %1309 = vmatprep.subr.mxu0 0.0
    %1310 = vmatpush1.msra.mxu0 0.0
    %1311 = vmatprep.subr.mxu0 0.0
    %1312 = vmatpush1.msra.mxu0 0.0
    %1313 = vmatprep.subr.mxu0 0.0
    %1314 = vmatpush1.msra.mxu0 0.0
    %1315 = vmatprep.subr.mxu0 0.0
    %1316 = vmatpush1.msra.mxu0 0.0
    %1317 = vmatprep.subr.mxu0 0.0
    %1318 = vmatpush1.msra.mxu0 0.0
    %1319 = vmatprep.subr.mxu0 0.0
    %1320 = vmatpush1.msra.mxu0 0.0
    %1321 = vmatprep.subr.mxu0 0.0
    %1322 = vmatpush1.msra.mxu0 0.0
    %1323 = vmatprep.subr.mxu0 0.0
    %1324 = vmatpush1.msra.mxu0 %v375
    %1325 = vmatprep.subr.mxu0 0.0
    %1326 = vmatpush2.msra.mxu0 0.0
    %1327 = vmatprep.subr.mxu0 0.0
    %1328 = vmatpush2.msra.mxu0 0.0
    %1329 = vmatprep.subr.mxu0 0.0
    %1330 = vmatpush2.msra.mxu0 0.0
    %1331 = vmatprep.subr.mxu0 0.0
    %1332 = vmatpush2.msra.mxu0 0.0
    %1333 = vmatprep.subr.mxu0 0.0
    %1334 = vmatpush2.msra.mxu0 0.0
    %1335 = vmatprep.subr.mxu0 0.0
    %1336 = vmatpush2.msra.mxu0 0.0
    %1337 = vmatprep.subr.mxu0 0.0
    %1338 = vmatpush2.msra.mxu0 0.0
    %1339 = vmatprep.subr.mxu0 0.0
    %1340 = vmatpush2.msra.mxu0 0.0
    %1341 = vmatprep.subr.mxu0 0.0
    %1342 = vmatpush2.msra.mxu0 0.0
    %1343 = vmatprep.subr.mxu0 0.0
    %1344 = vmatpush2.msra.mxu0 0.0
    %1345 = vmatprep.subr.mxu0 0.0
    %1346 = vmatpush2.msra.mxu0 0.0
    %1347 = vmatprep.subr.mxu0 0.0
    %1348 = vmatpush2.msra.mxu0 0.0
    %1349 = vmatprep.subr.mxu0 0.0
    %1350 = vmatpush2.msra.mxu0 0.0
    %1351 = vmatprep.subr.mxu0 0.0
    %1352 = vmatpush2.msra.mxu0 0.0
    %1353 = vmatprep.subr.mxu0 0.0
    %1354 = vmatpush2.msra.mxu0 0.0
    %1355 = vmatprep.subr.mxu0 0.0
    %1356 = vmatpush2.msra.mxu0 0.0
    %1357 = vmatprep.mubr.f32.mxu0 0.0
    %1358 = vmatmul.mubr.f32.gmra.mxu0 %v1291
    %v1359 = vpop.f32.mrf.mxu0
    %v1360 = vadd.f32 0.0, %v1359
    %v1361 = vpop.f32.mrf.mxu0
    %1362 = vdwg.mxu0
    %v1363 = vmul.f32 %v1287, %v1046
    %v1364 = vmul.f32 %v1360, %v1046
    %v1365 = vadd.f32 %v1041, %v1363
    %v1366 = vadd.f32 %v1042, %v1364
    %v1367 = vlaneseq
    %v1368 = vshrl.u32 %v1367, 7
    %v1369 = vsub.s32 2, %v1368
    %v1370 = vrot.slane %v37, %v1369
    %v1371 = vmul.f32 %v196, %v1370
    %v1372 = vmul.f32 %v197, %v1370
    %v1374 = vsel %vm110, %v1371, 0
    %1376 = vmatprep.subr.mxu0 0.0
    %1377 = vmatpush1.xpose.msra.mxu0 0.0
    %1378 = vmatprep.subr.mxu0 0.0
    %1379 = vmatpush1.xpose.msra.mxu0 0.0
    %1380 = vmatprep.subr.mxu0 0.0
    %1381 = vmatpush1.xpose.msra.mxu0 0.0
    %1382 = vmatprep.subr.mxu0 0.0
    %1383 = vmatpush1.xpose.msra.mxu0 0.0
    %1384 = vmatprep.subr.mxu0 0.0
    %1385 = vmatpush1.xpose.msra.mxu0 0.0
    %1386 = vmatprep.subr.mxu0 0.0
    %1387 = vmatpush1.xpose.msra.mxu0 0.0
    %1388 = vmatprep.subr.mxu0 0.0
    %1389 = vmatpush1.xpose.msra.mxu0 0.0
    %1390 = vmatprep.subr.mxu0 0.0
    %1391 = vmatpush1.xpose.msra.mxu0 0.0
    %1392 = vmatprep.subr.mxu0 0.0
    %1393 = vmatpush1.xpose.msra.mxu0 0.0
    %1394 = vmatprep.subr.mxu0 0.0
    %1395 = vmatpush1.xpose.msra.mxu0 0.0
    %1396 = vmatprep.subr.mxu0 0.0
    %1397 = vmatpush1.xpose.msra.mxu0 0.0
    %1398 = vmatprep.subr.mxu0 0.0
    %1399 = vmatpush1.xpose.msra.mxu0 0.0
    %1400 = vmatprep.subr.mxu0 0.0
    %1401 = vmatpush1.xpose.msra.mxu0 0.0
    %1402 = vmatprep.subr.mxu0 0.0
    %1403 = vmatpush1.xpose.msra.mxu0 0.0
    %1404 = vmatprep.subr.mxu0 0.0
    %1405 = vmatpush1.xpose.msra.mxu0 0.0
    %1406 = vmatprep.subr.mxu0 0.0
    %1407 = vmatpush1.xpose.msra.mxu0 %v400
    %1408 = vmatprep.subr.mxu0 0.0
    %1409 = vmatpush2.xpose.msra.mxu0 0.0
    %1410 = vmatprep.subr.mxu0 0.0
    %1411 = vmatpush2.xpose.msra.mxu0 0.0
    %1412 = vmatprep.subr.mxu0 0.0
    %1413 = vmatpush2.xpose.msra.mxu0 0.0
    %1414 = vmatprep.subr.mxu0 0.0
    %1415 = vmatpush2.xpose.msra.mxu0 0.0
    %1416 = vmatprep.subr.mxu0 0.0
    %1417 = vmatpush2.xpose.msra.mxu0 0.0
    %1418 = vmatprep.subr.mxu0 0.0
    %1419 = vmatpush2.xpose.msra.mxu0 0.0
    %1420 = vmatprep.subr.mxu0 0.0
    %1421 = vmatpush2.xpose.msra.mxu0 0.0
    %1422 = vmatprep.subr.mxu0 0.0
    %1423 = vmatpush2.xpose.msra.mxu0 0.0
    %1424 = vmatprep.subr.mxu0 0.0
    %1425 = vmatpush2.xpose.msra.mxu0 0.0
    %1426 = vmatprep.subr.mxu0 0.0
    %1427 = vmatpush2.xpose.msra.mxu0 0.0
    %1428 = vmatprep.subr.mxu0 0.0
    %1429 = vmatpush2.xpose.msra.mxu0 0.0
    %1430 = vmatprep.subr.mxu0 0.0
    %1431 = vmatpush2.xpose.msra.mxu0 0.0
    %1432 = vmatprep.subr.mxu0 0.0
    %1433 = vmatpush2.xpose.msra.mxu0 0.0
    %1434 = vmatprep.subr.mxu0 0.0
    %1435 = vmatpush2.xpose.msra.mxu0 0.0
    %1436 = vmatprep.subr.mxu0 0.0
    %1437 = vmatpush2.xpose.msra.mxu0 0.0
    %1438 = vmatprep.subr.mxu0 0.0
    %1439 = vmatpush2.xpose.msra.mxu0 0.0
    %1440 = vmatprep.mubr.f32.mxu0 0.0
    %1441 = vmatmul.mubr.f32.gmra.mxu0 %v1374
    %v1442 = vpop.f32.mrf.mxu0
    %v1443 = vadd.f32 %v389, %v1442
    %v1444 = vpop.f32.mrf.mxu0
    %1445 = vdwg.mxu0
    %v1447 = vsel %vm110, %v1372, 0
    %1449 = vmatprep.subr.mxu0 0.0
    %1450 = vmatpush1.xpose.msra.mxu0 0.0
    %1451 = vmatprep.subr.mxu0 0.0
    %1452 = vmatpush1.xpose.msra.mxu0 0.0
    %1453 = vmatprep.subr.mxu0 0.0
    %1454 = vmatpush1.xpose.msra.mxu0 0.0
    %1455 = vmatprep.subr.mxu0 0.0
    %1456 = vmatpush1.xpose.msra.mxu0 0.0
    %1457 = vmatprep.subr.mxu0 0.0
    %1458 = vmatpush1.xpose.msra.mxu0 0.0
    %1459 = vmatprep.subr.mxu0 0.0
    %1460 = vmatpush1.xpose.msra.mxu0 0.0
    %1461 = vmatprep.subr.mxu0 0.0
    %1462 = vmatpush1.xpose.msra.mxu0 0.0
    %1463 = vmatprep.subr.mxu0 0.0
    %1464 = vmatpush1.xpose.msra.mxu0 0.0
    %1465 = vmatprep.subr.mxu0 0.0
    %1466 = vmatpush1.xpose.msra.mxu0 0.0
    %1467 = vmatprep.subr.mxu0 0.0
    %1468 = vmatpush1.xpose.msra.mxu0 0.0
    %1469 = vmatprep.subr.mxu0 0.0
    %1470 = vmatpush1.xpose.msra.mxu0 0.0
    %1471 = vmatprep.subr.mxu0 0.0
    %1472 = vmatpush1.xpose.msra.mxu0 0.0
    %1473 = vmatprep.subr.mxu0 0.0
    %1474 = vmatpush1.xpose.msra.mxu0 0.0
    %1475 = vmatprep.subr.mxu0 0.0
    %1476 = vmatpush1.xpose.msra.mxu0 0.0
    %1477 = vmatprep.subr.mxu0 0.0
    %1478 = vmatpush1.xpose.msra.mxu0 0.0
    %1479 = vmatprep.subr.mxu0 0.0
    %1480 = vmatpush1.xpose.msra.mxu0 %v476
    %1481 = vmatprep.subr.mxu0 0.0
    %1482 = vmatpush2.xpose.msra.mxu0 0.0
    %1483 = vmatprep.subr.mxu0 0.0
    %1484 = vmatpush2.xpose.msra.mxu0 0.0
    %1485 = vmatprep.subr.mxu0 0.0
    %1486 = vmatpush2.xpose.msra.mxu0 0.0
    %1487 = vmatprep.subr.mxu0 0.0
    %1488 = vmatpush2.xpose.msra.mxu0 0.0
    %1489 = vmatprep.subr.mxu0 0.0
    %1490 = vmatpush2.xpose.msra.mxu0 0.0
    %1491 = vmatprep.subr.mxu0 0.0
    %1492 = vmatpush2.xpose.msra.mxu0 0.0
    %1493 = vmatprep.subr.mxu0 0.0
    %1494 = vmatpush2.xpose.msra.mxu0 0.0
    %1495 = vmatprep.subr.mxu0 0.0
    %1496 = vmatpush2.xpose.msra.mxu0 0.0
    %1497 = vmatprep.subr.mxu0 0.0
    %1498 = vmatpush2.xpose.msra.mxu0 0.0
    %1499 = vmatprep.subr.mxu0 0.0
    %1500 = vmatpush2.xpose.msra.mxu0 0.0
    %1501 = vmatprep.subr.mxu0 0.0
    %1502 = vmatpush2.xpose.msra.mxu0 0.0
    %1503 = vmatprep.subr.mxu0 0.0
    %1504 = vmatpush2.xpose.msra.mxu0 0.0
    %1505 = vmatprep.subr.mxu0 0.0
    %1506 = vmatpush2.xpose.msra.mxu0 0.0
    %1507 = vmatprep.subr.mxu0 0.0
    %1508 = vmatpush2.xpose.msra.mxu0 0.0
    %1509 = vmatprep.subr.mxu0 0.0
    %1510 = vmatpush2.xpose.msra.mxu0 0.0
    %1511 = vmatprep.subr.mxu0 0.0
    %1512 = vmatpush2.xpose.msra.mxu0 0.0
    %1513 = vmatprep.mubr.f32.mxu0 0.0
    %1514 = vmatmul.mubr.f32.gmra.mxu0 %v1447
    %v1515 = vpop.f32.mrf.mxu0
    %v1516 = vadd.f32 %v393, %v1515
    %v1517 = vpop.f32.mrf.mxu0
    %1518 = vdwg.mxu0
    %v1519 = vsel %vm548, %v1443, -inf
    %1520 = vmax.xlane.f32.xlu0 %v1519
    %v1521 = vpop.xlane.xlu0 %1520
    %v1522 = vsel %vm548, %v1516, -inf
    %1523 = vmax.xlane.f32.xlu0 %v1522
    %v1524 = vpop.xlane.xlu0 %1523
    %v1525 = vsub.f32 %v1443, %v1521
    %v1526 = vsub.f32 %v1516, %v1524
    %v1527 = vmul.f32 %v1525, 1.442695
    %v1528 = vpow.pop %v1527
    %v1529 = vmul.f32 %v1526, 1.442695
    %v1530 = vpow.pop %v1529
    %v1531 = vsel %vm548, %v1528, 0.0
    %1532 = vadd.xlane.f32.xlu0 %v1531
    %v1533 = vpop.xlane.xlu0 %1532
    %v1534 = vsel %vm548, %v1530, 0.0
    %1535 = vadd.xlane.f32.xlu0 %v1534
    %v1536 = vpop.xlane.xlu0 %1535
    %v1537 = vrcp.pop %v1533
    %v1538 = vrcp.pop %v1536
    %v1539 = vmul.f32 %v1528, %v1537
    %v1540 = vmul.f32 %v1530, %v1538
    %v1542 = vsel %vm548, %v1539, 0
    %1544 = vmatprep.subr.mxu0 0.0
    %1545 = vmatpush1.msra.mxu0 0.0
    %1546 = vmatprep.subr.mxu0 0.0
    %1547 = vmatpush1.msra.mxu0 0.0
    %1548 = vmatprep.subr.mxu0 0.0
    %1549 = vmatpush1.msra.mxu0 0.0
    %1550 = vmatprep.subr.mxu0 0.0
    %1551 = vmatpush1.msra.mxu0 0.0
    %1552 = vmatprep.subr.mxu0 0.0
    %1553 = vmatpush1.msra.mxu0 0.0
    %1554 = vmatprep.subr.mxu0 0.0
    %1555 = vmatpush1.msra.mxu0 0.0
    %1556 = vmatprep.subr.mxu0 0.0
    %1557 = vmatpush1.msra.mxu0 0.0
    %1558 = vmatprep.subr.mxu0 0.0
    %1559 = vmatpush1.msra.mxu0 0.0
    %1560 = vmatprep.subr.mxu0 0.0
    %1561 = vmatpush1.msra.mxu0 0.0
    %1562 = vmatprep.subr.mxu0 0.0
    %1563 = vmatpush1.msra.mxu0 0.0
    %1564 = vmatprep.subr.mxu0 0.0
    %1565 = vmatpush1.msra.mxu0 0.0
    %1566 = vmatprep.subr.mxu0 0.0
    %1567 = vmatpush1.msra.mxu0 0.0
    %1568 = vmatprep.subr.mxu0 0.0
    %1569 = vmatpush1.msra.mxu0 0.0
    %1570 = vmatprep.subr.mxu0 0.0
    %1571 = vmatpush1.msra.mxu0 0.0
    %1572 = vmatprep.subr.mxu0 0.0
    %1573 = vmatpush1.msra.mxu0 0.0
    %1574 = vmatprep.subr.mxu0 0.0
    %1575 = vmatpush1.msra.mxu0 %v374
    %1576 = vmatprep.subr.mxu0 0.0
    %1577 = vmatpush2.msra.mxu0 0.0
    %1578 = vmatprep.subr.mxu0 0.0
    %1579 = vmatpush2.msra.mxu0 0.0
    %1580 = vmatprep.subr.mxu0 0.0
    %1581 = vmatpush2.msra.mxu0 0.0
    %1582 = vmatprep.subr.mxu0 0.0
    %1583 = vmatpush2.msra.mxu0 0.0
    %1584 = vmatprep.subr.mxu0 0.0
    %1585 = vmatpush2.msra.mxu0 0.0
    %1586 = vmatprep.subr.mxu0 0.0
    %1587 = vmatpush2.msra.mxu0 0.0
    %1588 = vmatprep.subr.mxu0 0.0
    %1589 = vmatpush2.msra.mxu0 0.0
    %1590 = vmatprep.subr.mxu0 0.0
    %1591 = vmatpush2.msra.mxu0 0.0
    %1592 = vmatprep.subr.mxu0 0.0
    %1593 = vmatpush2.msra.mxu0 0.0
    %1594 = vmatprep.subr.mxu0 0.0
    %1595 = vmatpush2.msra.mxu0 0.0
    %1596 = vmatprep.subr.mxu0 0.0
    %1597 = vmatpush2.msra.mxu0 0.0
    %1598 = vmatprep.subr.mxu0 0.0
    %1599 = vmatpush2.msra.mxu0 0.0
    %1600 = vmatprep.subr.mxu0 0.0
    %1601 = vmatpush2.msra.mxu0 0.0
    %1602 = vmatprep.subr.mxu0 0.0
    %1603 = vmatpush2.msra.mxu0 0.0
    %1604 = vmatprep.subr.mxu0 0.0
    %1605 = vmatpush2.msra.mxu0 0.0
    %1606 = vmatprep.subr.mxu0 0.0
    %1607 = vmatpush2.msra.mxu0 0.0
    %1608 = vmatprep.mubr.f32.mxu0 0.0
    %1609 = vmatmul.mubr.f32.gmra.mxu0 %v1542
    %v1610 = vpop.f32.mrf.mxu0
    %v1611 = vadd.f32 0.0, %v1610
    %v1612 = vpop.f32.mrf.mxu0
    %1613 = vdwg.mxu0
    %v1615 = vsel %vm548, %v1540, 0
    %1617 = vmatprep.subr.mxu0 0.0
    %1618 = vmatpush1.msra.mxu0 0.0
    %1619 = vmatprep.subr.mxu0 0.0
    %1620 = vmatpush1.msra.mxu0 0.0
    %1621 = vmatprep.subr.mxu0 0.0
    %1622 = vmatpush1.msra.mxu0 0.0
    %1623 = vmatprep.subr.mxu0 0.0
    %1624 = vmatpush1.msra.mxu0 0.0
    %1625 = vmatprep.subr.mxu0 0.0
    %1626 = vmatpush1.msra.mxu0 0.0
    %1627 = vmatprep.subr.mxu0 0.0
    %1628 = vmatpush1.msra.mxu0 0.0
    %1629 = vmatprep.subr.mxu0 0.0
    %1630 = vmatpush1.msra.mxu0 0.0
    %1631 = vmatprep.subr.mxu0 0.0
    %1632 = vmatpush1.msra.mxu0 0.0
    %1633 = vmatprep.subr.mxu0 0.0
    %1634 = vmatpush1.msra.mxu0 0.0
    %1635 = vmatprep.subr.mxu0 0.0
    %1636 = vmatpush1.msra.mxu0 0.0
    %1637 = vmatprep.subr.mxu0 0.0
    %1638 = vmatpush1.msra.mxu0 0.0
    %1639 = vmatprep.subr.mxu0 0.0
    %1640 = vmatpush1.msra.mxu0 0.0
    %1641 = vmatprep.subr.mxu0 0.0
    %1642 = vmatpush1.msra.mxu0 0.0
    %1643 = vmatprep.subr.mxu0 0.0
    %1644 = vmatpush1.msra.mxu0 0.0
    %1645 = vmatprep.subr.mxu0 0.0
    %1646 = vmatpush1.msra.mxu0 0.0
    %1647 = vmatprep.subr.mxu0 0.0
    %1648 = vmatpush1.msra.mxu0 %v375
    %1649 = vmatprep.subr.mxu0 0.0
    %1650 = vmatpush2.msra.mxu0 0.0
    %1651 = vmatprep.subr.mxu0 0.0
    %1652 = vmatpush2.msra.mxu0 0.0
    %1653 = vmatprep.subr.mxu0 0.0
    %1654 = vmatpush2.msra.mxu0 0.0
    %1655 = vmatprep.subr.mxu0 0.0
    %1656 = vmatpush2.msra.mxu0 0.0
    %1657 = vmatprep.subr.mxu0 0.0
    %1658 = vmatpush2.msra.mxu0 0.0
    %1659 = vmatprep.subr.mxu0 0.0
    %1660 = vmatpush2.msra.mxu0 0.0
    %1661 = vmatprep.subr.mxu0 0.0
    %1662 = vmatpush2.msra.mxu0 0.0
    %1663 = vmatprep.subr.mxu0 0.0
    %1664 = vmatpush2.msra.mxu0 0.0
    %1665 = vmatprep.subr.mxu0 0.0
    %1666 = vmatpush2.msra.mxu0 0.0
    %1667 = vmatprep.subr.mxu0 0.0
    %1668 = vmatpush2.msra.mxu0 0.0
    %1669 = vmatprep.subr.mxu0 0.0
    %1670 = vmatpush2.msra.mxu0 0.0
    %1671 = vmatprep.subr.mxu0 0.0
    %1672 = vmatpush2.msra.mxu0 0.0
    %1673 = vmatprep.subr.mxu0 0.0
    %1674 = vmatpush2.msra.mxu0 0.0
    %1675 = vmatprep.subr.mxu0 0.0
    %1676 = vmatpush2.msra.mxu0 0.0
    %1677 = vmatprep.subr.mxu0 0.0
    %1678 = vmatpush2.msra.mxu0 0.0
    %1679 = vmatprep.subr.mxu0 0.0
    %1680 = vmatpush2.msra.mxu0 0.0
    %1681 = vmatprep.mubr.f32.mxu0 0.0
    %1682 = vmatmul.mubr.f32.gmra.mxu0 %v1615
    %v1683 = vpop.f32.mrf.mxu0
    %v1684 = vadd.f32 0.0, %v1683
    %v1685 = vpop.f32.mrf.mxu0
    %1686 = vdwg.mxu0
    %v1687 = vmul.f32 %v1611, %v1370
    %v1688 = vmul.f32 %v1684, %v1370
    %v1689 = vadd.f32 %v1365, %v1687
    %v1690 = vadd.f32 %v1366, %v1688
    %s1691 = scalar_lea.vmem [#allocation2], 96
    %v1692 = vld [vmem:[%s1691] sm:$0xff]
    %v1693 = vld [vmem:[%s1691 + $0x8] sm:$0xff]
    %v1694 = vld [vmem:[%s1691 + $0x10] sm:$0xff]
    %v1695 = vld [vmem:[%s1691 + $0x18] sm:$0xff]
    %v1697 = vsel %vm110, %v1689, 0
    %v1700 = vsel %vm110, %v1690, 0
    %1702 = vmatprep.subr.mxu0 0.0
    %1703 = vmatpush1.msra.mxu0 0.0
    %1704 = vmatprep.subr.mxu0 0.0
    %1705 = vmatpush1.msra.mxu0 0.0
    %1706 = vmatprep.subr.mxu0 0.0
    %1707 = vmatpush1.msra.mxu0 0.0
    %1708 = vmatprep.subr.mxu0 0.0
    %1709 = vmatpush1.msra.mxu0 0.0
    %1710 = vmatprep.subr.mxu0 0.0
    %1711 = vmatpush1.msra.mxu0 0.0
    %1712 = vmatprep.subr.mxu0 0.0
    %1713 = vmatpush1.msra.mxu0 0.0
    %1714 = vmatprep.subr.mxu0 0.0
    %1715 = vmatpush1.msra.mxu0 0.0
    %1716 = vmatprep.subr.mxu0 0.0
    %1717 = vmatpush1.msra.mxu0 0.0
    %1718 = vmatprep.subr.mxu0 0.0
    %1719 = vmatpush1.msra.mxu0 0.0
    %1720 = vmatprep.subr.mxu0 0.0
    %1721 = vmatpush1.msra.mxu0 0.0
    %1722 = vmatprep.subr.mxu0 0.0
    %1723 = vmatpush1.msra.mxu0 0.0
    %1724 = vmatprep.subr.mxu0 0.0
    %1725 = vmatpush1.msra.mxu0 0.0
    %1726 = vmatprep.subr.mxu0 0.0
    %1727 = vmatpush1.msra.mxu0 %v1695
    %1728 = vmatprep.subr.mxu0 0.0
    %1729 = vmatpush1.msra.mxu0 %v1694
    %1730 = vmatprep.subr.mxu0 0.0
    %1731 = vmatpush1.msra.mxu0 %v1693
    %1732 = vmatprep.subr.mxu0 0.0
    %1733 = vmatpush1.msra.mxu0 %v1692
    %1734 = vmatprep.subr.mxu0 0.0
    %1735 = vmatpush2.msra.mxu0 0.0
    %1736 = vmatprep.subr.mxu0 0.0
    %1737 = vmatpush2.msra.mxu0 0.0
    %1738 = vmatprep.subr.mxu0 0.0
    %1739 = vmatpush2.msra.mxu0 0.0
    %1740 = vmatprep.subr.mxu0 0.0
    %1741 = vmatpush2.msra.mxu0 0.0
    %1742 = vmatprep.subr.mxu0 0.0
    %1743 = vmatpush2.msra.mxu0 0.0
    %1744 = vmatprep.subr.mxu0 0.0
    %1745 = vmatpush2.msra.mxu0 0.0
    %1746 = vmatprep.subr.mxu0 0.0
    %1747 = vmatpush2.msra.mxu0 0.0
    %1748 = vmatprep.subr.mxu0 0.0
    %1749 = vmatpush2.msra.mxu0 0.0
    %1750 = vmatprep.subr.mxu0 0.0
    %1751 = vmatpush2.msra.mxu0 0.0
    %1752 = vmatprep.subr.mxu0 0.0
    %1753 = vmatpush2.msra.mxu0 0.0
    %1754 = vmatprep.subr.mxu0 0.0
    %1755 = vmatpush2.msra.mxu0 0.0
    %1756 = vmatprep.subr.mxu0 0.0
    %1757 = vmatpush2.msra.mxu0 0.0
    %1758 = vmatprep.subr.mxu0 0.0
    %1759 = vmatpush2.msra.mxu0 0.0
    %1760 = vmatprep.subr.mxu0 0.0
    %1761 = vmatpush2.msra.mxu0 0.0
    %1762 = vmatprep.subr.mxu0 0.0
    %1763 = vmatpush2.msra.mxu0 0.0
    %1764 = vmatprep.subr.mxu0 0.0
    %1765 = vmatpush2.msra.mxu0 0.0
    %1766 = vmatprep.mubr.f32.mxu0 0.0
    %1767 = vmatmul.mubr.f32.gmra.mxu0 %v1697
    %v1768 = vpop.f32.mrf.mxu0
    %v1769 = vadd.f32 0.0, %v1768
    %v1770 = vpop.f32.mrf.mxu0
    %1771 = vmatprep.mubr.f32.mxu0 0.0
    %1772 = vmatmul.mubr.f32.gmra.mxu0 %v1700
    %v1773 = vpop.f32.mrf.mxu0
    %v1774 = vadd.f32 0.0, %v1773
    %v1775 = vpop.f32.mrf.mxu0
    %1776 = vdwg.mxu0
    %v1777 = vlaneseq
    %v1778 = vshrl.u32 %v1777, 7
    %v1779 = vsub.s32 6, %v1778
    %v1780 = vrot.slane %v35, %v1779
    %v1781 = vadd.f32 %v1769, %v1780
    %v1782 = vadd.f32 %v1774, %v1780
    %v1783 = vadd.f32 %v1781, %v76
    %v1784 = vadd.f32 %v1782, %v77
    %v1785 = vsel %vm110, %v1783, 0.0
    %1786 = vadd.xlane.f32.xlu0 %v1785
    %v1787 = vpop.xlane.xlu0 %1786
    %v1788 = vsel %vm110, %v1784, 0.0
    %1789 = vadd.xlane.f32.xlu0 %v1788
    %v1790 = vpop.xlane.xlu0 %1789
    %v1791 = vrcp.pop 32.0
    %v1792 = vmul.f32 %v1787, %v1791
    %v1793 = vmul.f32 %v1790, %v1791
    %v1794 = vsub.f32 %v1783, %v1792
    %v1795 = vsub.f32 %v1784, %v1793
    %v1796 = vmul.f32 %v1794, %v1794
    %v1797 = vmul.f32 %v1795, %v1795
    %v1798 = vsel %vm110, %v1796, 0.0
    %1799 = vadd.xlane.f32.xlu0 %v1798
    %v1800 = vpop.xlane.xlu0 %1799
    %v1801 = vsel %vm110, %v1797, 0.0
    %1802 = vadd.xlane.f32.xlu0 %v1801
    %v1803 = vpop.xlane.xlu0 %1802
    %v1804 = vmul.f32 %v1800, %v1791
    %v1805 = vmul.f32 %v1803, %v1791
    %v1806 = vadd.f32 %v1804, 1e-05
    %v1807 = vadd.f32 %v1805, 1e-05
    %v1808 = vrsqrt.pop %v1806
    %v1809 = vrsqrt.pop %v1807
    %v1810 = vmul.f32 %v1794, %v1808
    %v1811 = vmul.f32 %v1795, %v1809
    %v1812 = vlaneseq
    %v1813 = vshrl.u32 %v1812, 7
    %v1814 = vsub.s32 7, %v1813
    %v1815 = vrot.slane %v35, %v1814
    %v1816 = vmul.f32 %v1810, %v1815
    %v1817 = vmul.f32 %v1811, %v1815
    %v1818 = vlaneseq
    %v1819 = vshrl.u32 %v1818, 7
    %v1820 = vsub.s32 0, %v1819
    %v1821 = vrot.slane %v36, %v1820
    %v1822 = vadd.f32 %v1816, %v1821
    %v1823 = vadd.f32 %v1817, %v1821
    %s1824 = scalar_lea.vmem [#allocation2], 128
    %v1825 = vld [vmem:[%s1824] sm:$0xff]
    %v1826 = vld [vmem:[%s1824 + $0x8] sm:$0xff]
    %v1827 = vld [vmem:[%s1824 + $0x10] sm:$0xff]
    %v1828 = vld [vmem:[%s1824 + $0x18] sm:$0xff]
    %v1830 = vsel %vm110, %v1822, 0
    %v1833 = vsel %vm110, %v1823, 0
    %1835 = vmatprep.subr.mxu0 0.0
    %1836 = vmatpush1.msra.mxu0 0.0
    %1837 = vmatprep.subr.mxu0 0.0
    %1838 = vmatpush1.msra.mxu0 0.0
    %1839 = vmatprep.subr.mxu0 0.0
    %1840 = vmatpush1.msra.mxu0 0.0
    %1841 = vmatprep.subr.mxu0 0.0
    %1842 = vmatpush1.msra.mxu0 0.0
    %1843 = vmatprep.subr.mxu0 0.0
    %1844 = vmatpush1.msra.mxu0 0.0
    %1845 = vmatprep.subr.mxu0 0.0
    %1846 = vmatpush1.msra.mxu0 0.0
    %1847 = vmatprep.subr.mxu0 0.0
    %1848 = vmatpush1.msra.mxu0 0.0
    %1849 = vmatprep.subr.mxu0 0.0
    %1850 = vmatpush1.msra.mxu0 0.0
    %1851 = vmatprep.subr.mxu0 0.0
    %1852 = vmatpush1.msra.mxu0 0.0
    %1853 = vmatprep.subr.mxu0 0.0
    %1854 = vmatpush1.msra.mxu0 0.0
    %1855 = vmatprep.subr.mxu0 0.0
    %1856 = vmatpush1.msra.mxu0 0.0
    %1857 = vmatprep.subr.mxu0 0.0
    %1858 = vmatpush1.msra.mxu0 0.0
    %1859 = vmatprep.subr.mxu0 0.0
    %1860 = vmatpush1.msra.mxu0 %v1828
    %1861 = vmatprep.subr.mxu0 0.0
    %1862 = vmatpush1.msra.mxu0 %v1827
    %1863 = vmatprep.subr.mxu0 0.0
    %1864 = vmatpush1.msra.mxu0 %v1826
    %1865 = vmatprep.subr.mxu0 0.0
    %1866 = vmatpush1.msra.mxu0 %v1825
    %1867 = vmatprep.subr.mxu0 0.0
    %1868 = vmatpush2.msra.mxu0 0.0
    %1869 = vmatprep.subr.mxu0 0.0
    %1870 = vmatpush2.msra.mxu0 0.0
    %1871 = vmatprep.subr.mxu0 0.0
    %1872 = vmatpush2.msra.mxu0 0.0
    %1873 = vmatprep.subr.mxu0 0.0
    %1874 = vmatpush2.msra.mxu0 0.0
    %1875 = vmatprep.subr.mxu0 0.0
    %1876 = vmatpush2.msra.mxu0 0.0
    %1877 = vmatprep.subr.mxu0 0.0
    %1878 = vmatpush2.msra.mxu0 0.0
    %1879 = vmatprep.subr.mxu0 0.0
    %1880 = vmatpush2.msra.mxu0 0.0
    %1881 = vmatprep.subr.mxu0 0.0
    %1882 = vmatpush2.msra.mxu0 0.0
    %1883 = vmatprep.subr.mxu0 0.0
    %1884 = vmatpush2.msra.mxu0 0.0
    %1885 = vmatprep.subr.mxu0 0.0
    %1886 = vmatpush2.msra.mxu0 0.0
    %1887 = vmatprep.subr.mxu0 0.0
    %1888 = vmatpush2.msra.mxu0 0.0
    %1889 = vmatprep.subr.mxu0 0.0
    %1890 = vmatpush2.msra.mxu0 0.0
    %1891 = vmatprep.subr.mxu0 0.0
    %1892 = vmatpush2.msra.mxu0 0.0
    %1893 = vmatprep.subr.mxu0 0.0
    %1894 = vmatpush2.msra.mxu0 0.0
    %1895 = vmatprep.subr.mxu0 0.0
    %1896 = vmatpush2.msra.mxu0 0.0
    %1897 = vmatprep.subr.mxu0 0.0
    %1898 = vmatpush2.msra.mxu0 0.0
    %1899 = vmatprep.mubr.f32.mxu0 0.0
    %1900 = vmatmul.mubr.f32.gmra.mxu0 %v1830
    %v1901 = vpop.f32.mrf.mxu0
    %v1902 = vadd.f32 0.0, %v1901
    %v1903 = vpop.f32.mrf.mxu0
    %1904 = vmatprep.mubr.f32.mxu0 0.0
    %1905 = vmatmul.mubr.f32.gmra.mxu0 %v1833
    %v1906 = vpop.f32.mrf.mxu0
    %v1907 = vadd.f32 0.0, %v1906
    %v1908 = vpop.f32.mrf.mxu0
    %1909 = vdwg.mxu0
    %v1910 = vlaneseq
    %v1911 = vshrl.u32 %v1910, 7
    %v1912 = vsub.s32 1, %v1911
    %v1913 = vrot.slane %v36, %v1912
    %v1914 = vadd.f32 %v1902, %v1913
    %v1915 = vadd.f32 %v1907, %v1913
    %v1916 = vmax.f32 %v1914, 0.0
    %v1917 = vmax.f32 %v1915, 0.0
    %s1918 = scalar_lea.vmem [#allocation2], 160
    %v1919 = vld [vmem:[%s1918] sm:$0xff]
    %v1920 = vld [vmem:[%s1918 + $0x8] sm:$0xff]
    %v1921 = vld [vmem:[%s1918 + $0x10] sm:$0xff]
    %v1922 = vld [vmem:[%s1918 + $0x18] sm:$0xff]
    %v1924 = vsel %vm110, %v1916, 0
    %v1927 = vsel %vm110, %v1917, 0
    %1929 = vmatprep.subr.mxu0 0.0
    %1930 = vmatpush1.msra.mxu0 0.0
    %1931 = vmatprep.subr.mxu0 0.0
    %1932 = vmatpush1.msra.mxu0 0.0
    %1933 = vmatprep.subr.mxu0 0.0
    %1934 = vmatpush1.msra.mxu0 0.0
    %1935 = vmatprep.subr.mxu0 0.0
    %1936 = vmatpush1.msra.mxu0 0.0
    %1937 = vmatprep.subr.mxu0 0.0
    %1938 = vmatpush1.msra.mxu0 0.0
    %1939 = vmatprep.subr.mxu0 0.0
    %1940 = vmatpush1.msra.mxu0 0.0
    %1941 = vmatprep.subr.mxu0 0.0
    %1942 = vmatpush1.msra.mxu0 0.0
    %1943 = vmatprep.subr.mxu0 0.0
    %1944 = vmatpush1.msra.mxu0 0.0
    %1945 = vmatprep.subr.mxu0 0.0
    %1946 = vmatpush1.msra.mxu0 0.0
    %1947 = vmatprep.subr.mxu0 0.0
    %1948 = vmatpush1.msra.mxu0 0.0
    %1949 = vmatprep.subr.mxu0 0.0
    %1950 = vmatpush1.msra.mxu0 0.0
    %1951 = vmatprep.subr.mxu0 0.0
    %1952 = vmatpush1.msra.mxu0 0.0
    %1953 = vmatprep.subr.mxu0 0.0
    %1954 = vmatpush1.msra.mxu0 %v1922
    %1955 = vmatprep.subr.mxu0 0.0
    %1956 = vmatpush1.msra.mxu0 %v1921
    %1957 = vmatprep.subr.mxu0 0.0
    %1958 = vmatpush1.msra.mxu0 %v1920
    %1959 = vmatprep.subr.mxu0 0.0
    %1960 = vmatpush1.msra.mxu0 %v1919
    %1961 = vmatprep.subr.mxu0 0.0
    %1962 = vmatpush2.msra.mxu0 0.0
    %1963 = vmatprep.subr.mxu0 0.0
    %1964 = vmatpush2.msra.mxu0 0.0
    %1965 = vmatprep.subr.mxu0 0.0
    %1966 = vmatpush2.msra.mxu0 0.0
    %1967 = vmatprep.subr.mxu0 0.0
    %1968 = vmatpush2.msra.mxu0 0.0
    %1969 = vmatprep.subr.mxu0 0.0
    %1970 = vmatpush2.msra.mxu0 0.0
    %1971 = vmatprep.subr.mxu0 0.0
    %1972 = vmatpush2.msra.mxu0 0.0
    %1973 = vmatprep.subr.mxu0 0.0
    %1974 = vmatpush2.msra.mxu0 0.0
    %1975 = vmatprep.subr.mxu0 0.0
    %1976 = vmatpush2.msra.mxu0 0.0
    %1977 = vmatprep.subr.mxu0 0.0
    %1978 = vmatpush2.msra.mxu0 0.0
    %1979 = vmatprep.subr.mxu0 0.0
    %1980 = vmatpush2.msra.mxu0 0.0
    %1981 = vmatprep.subr.mxu0 0.0
    %1982 = vmatpush2.msra.mxu0 0.0
    %1983 = vmatprep.subr.mxu0 0.0
    %1984 = vmatpush2.msra.mxu0 0.0
    %1985 = vmatprep.subr.mxu0 0.0
    %1986 = vmatpush2.msra.mxu0 0.0
    %1987 = vmatprep.subr.mxu0 0.0
    %1988 = vmatpush2.msra.mxu0 0.0
    %1989 = vmatprep.subr.mxu0 0.0
    %1990 = vmatpush2.msra.mxu0 0.0
    %1991 = vmatprep.subr.mxu0 0.0
    %1992 = vmatpush2.msra.mxu0 0.0
    %1993 = vmatprep.mubr.f32.mxu0 0.0
    %1994 = vmatmul.mubr.f32.gmra.mxu0 %v1924
    %v1995 = vpop.f32.mrf.mxu0
    %v1996 = vadd.f32 0.0, %v1995
    %v1997 = vpop.f32.mrf.mxu0
    %1998 = vmatprep.mubr.f32.mxu0 0.0
    %1999 = vmatmul.mubr.f32.gmra.mxu0 %v1927
    %v2000 = vpop.f32.mrf.mxu0
    %v2001 = vadd.f32 0.0, %v2000
    %v2002 = vpop.f32.mrf.mxu0
    %2003 = vdwg.mxu0
    %v2004 = vlaneseq
    %v2005 = vshrl.u32 %v2004, 7
    %v2006 = vsub.s32 2, %v2005
    %v2007 = vrot.slane %v36, %v2006
    %v2008 = vadd.f32 %v1996, %v2007
    %v2009 = vadd.f32 %v2001, %v2007
    %v2010 = vadd.f32 %v2008, %v76
    %v2011 = vadd.f32 %v2009, %v77
    %v2012 = vsel %vm110, %v2010, 0.0
    %2013 = vadd.xlane.f32.xlu0 %v2012
    %v2014 = vpop.xlane.xlu0 %2013
    %v2015 = vsel %vm110, %v2011, 0.0
    %2016 = vadd.xlane.f32.xlu0 %v2015
    %v2017 = vpop.xlane.xlu0 %2016
    %v2018 = vmul.f32 %v2014, %v1791
    %v2019 = vmul.f32 %v2017, %v1791
    %v2020 = vsub.f32 %v2010, %v2018
    %v2021 = vsub.f32 %v2011, %v2019
    %v2022 = vmul.f32 %v2020, %v2020
    %v2023 = vmul.f32 %v2021, %v2021
    %v2024 = vsel %vm110, %v2022, 0.0
    %2025 = vadd.xlane.f32.xlu0 %v2024
    %v2026 = vpop.xlane.xlu0 %2025
    %v2027 = vsel %vm110, %v2023, 0.0
    %2028 = vadd.xlane.f32.xlu0 %v2027
    %v2029 = vpop.xlane.xlu0 %2028
    %v2030 = vmul.f32 %v2026, %v1791
    %v2031 = vmul.f32 %v2029, %v1791
    %v2032 = vadd.f32 %v2030, 1e-05
    %v2033 = vadd.f32 %v2031, 1e-05
    %v2034 = vrsqrt.pop %v2032
    %v2035 = vrsqrt.pop %v2033
    %v2036 = vmul.f32 %v2020, %v2034
    %v2037 = vmul.f32 %v2021, %v2035
    %v2038 = vmul.f32 %v2036, %v1815
    %v2039 = vmul.f32 %v2037, %v1815
    %v2040 = vadd.f32 %v2038, %v1821
    %v2041 = vadd.f32 %v2039, %v1821
    %v2042 = vsel %vm110, %v2040, 0.0
    %v2043 = vrot.slane %v2042, 4
    %v2044 = vadd.f32 %v2042, %v2043
    %v2045 = vrot.slane %v2044, 2
    %v2046 = vadd.f32 %v2044, %v2045
    %v2047 = vrot.slane %v2046, 1
    %v2048 = vadd.f32 %v2046, %v2047
    %v2049 = vsel %vm110, %v2041, 0.0
    %v2050 = vrot.slane %v2049, 4
    %v2051 = vadd.f32 %v2049, %v2050
    %v2052 = vrot.slane %v2051, 2
    %v2053 = vadd.f32 %v2051, %v2052
    %v2054 = vrot.slane %v2053, 1
    %v2055 = vadd.f32 %v2053, %v2054
    %v2056 = vrcp.pop 8.0
    %v2057 = vmul.f32 %v2048, %v2056
    %v2058 = vmul.f32 %v2055, %v2056
    %s2059 = scalar_lea.vmem [#allocation2], 192
    %v2060 = vld [vmem:[%s2059] sm:$0xff]
    %v2061 = vld [vmem:[%s2059 + $0x8] sm:$0xff]
    %v2062 = vld [vmem:[%s2059 + $0x10] sm:$0xff]
    %v2063 = vld [vmem:[%s2059 + $0x18] sm:$0xff]
    %v2064 = vlaneseq
    %v2065 = vshrl.u32 %v2064, 7
    %v2066 = vsub.s32 3, %v2065
    %v2067 = vrot.slane %v36, %v2066
    %vm2070 = vcmask 1041409
    %v2071 = vsel %vm2070, %v2058, %v2057
    %v2072 = vsel %vm110, %v2071, 0
    %2074 = vmatprep.subr.mxu0 0.0
    %2075 = vmatpush1.msra.mxu0 0.0
    %2076 = vmatprep.subr.mxu0 0.0
    %2077 = vmatpush1.msra.mxu0 0.0
    %2078 = vmatprep.subr.mxu0 0.0
    %2079 = vmatpush1.msra.mxu0 0.0
    %2080 = vmatprep.subr.mxu0 0.0
    %2081 = vmatpush1.msra.mxu0 0.0
    %2082 = vmatprep.subr.mxu0 0.0
    %2083 = vmatpush1.msra.mxu0 0.0
    %2084 = vmatprep.subr.mxu0 0.0
    %2085 = vmatpush1.msra.mxu0 0.0
    %2086 = vmatprep.subr.mxu0 0.0
    %2087 = vmatpush1.msra.mxu0 0.0
    %2088 = vmatprep.subr.mxu0 0.0
    %2089 = vmatpush1.msra.mxu0 0.0
    %2090 = vmatprep.subr.mxu0 0.0
    %2091 = vmatpush1.msra.mxu0 0.0
    %2092 = vmatprep.subr.mxu0 0.0
    %2093 = vmatpush1.msra.mxu0 0.0
    %2094 = vmatprep.subr.mxu0 0.0
    %2095 = vmatpush1.msra.mxu0 0.0
    %2096 = vmatprep.subr.mxu0 0.0
    %2097 = vmatpush1.msra.mxu0 0.0
    %2098 = vmatprep.subr.mxu0 0.0
    %2099 = vmatpush1.msra.mxu0 %v2063
    %2100 = vmatprep.subr.mxu0 0.0
    %2101 = vmatpush1.msra.mxu0 %v2062
    %2102 = vmatprep.subr.mxu0 0.0
    %2103 = vmatpush1.msra.mxu0 %v2061
    %2104 = vmatprep.subr.mxu0 0.0
    %2105 = vmatpush1.msra.mxu0 %v2060
    %2106 = vmatprep.subr.mxu0 0.0
    %2107 = vmatpush2.msra.mxu0 0.0
    %2108 = vmatprep.subr.mxu0 0.0
    %2109 = vmatpush2.msra.mxu0 0.0
    %2110 = vmatprep.subr.mxu0 0.0
    %2111 = vmatpush2.msra.mxu0 0.0
    %2112 = vmatprep.subr.mxu0 0.0
    %2113 = vmatpush2.msra.mxu0 0.0
    %2114 = vmatprep.subr.mxu0 0.0
    %2115 = vmatpush2.msra.mxu0 0.0
    %2116 = vmatprep.subr.mxu0 0.0
    %2117 = vmatpush2.msra.mxu0 0.0
    %2118 = vmatprep.subr.mxu0 0.0
    %2119 = vmatpush2.msra.mxu0 0.0
    %2120 = vmatprep.subr.mxu0 0.0
    %2121 = vmatpush2.msra.mxu0 0.0
    %2122 = vmatprep.subr.mxu0 0.0
    %2123 = vmatpush2.msra.mxu0 0.0
    %2124 = vmatprep.subr.mxu0 0.0
    %2125 = vmatpush2.msra.mxu0 0.0
    %2126 = vmatprep.subr.mxu0 0.0
    %2127 = vmatpush2.msra.mxu0 0.0
    %2128 = vmatprep.subr.mxu0 0.0
    %2129 = vmatpush2.msra.mxu0 0.0
    %2130 = vmatprep.subr.mxu0 0.0
    %2131 = vmatpush2.msra.mxu0 0.0
    %2132 = vmatprep.subr.mxu0 0.0
    %2133 = vmatpush2.msra.mxu0 0.0
    %2134 = vmatprep.subr.mxu0 0.0
    %2135 = vmatpush2.msra.mxu0 0.0
    %2136 = vmatprep.subr.mxu0 0.0
    %2137 = vmatpush2.msra.mxu0 0.0
    %2138 = vmatprep.mubr.f32.mxu0 0.0
    %2139 = vmatmul.mubr.f32.gmra.mxu0 %v2072
    %v2140 = vpop.f32.mrf.mxu0
    %v2141 = vadd.f32 %v2067, %v2140
    %v2142 = vpop.f32.mrf.mxu0
    %2143 = vdwg.mxu0
    %v2144 = vmax.f32 %v2141, 0.0
    %v2145 = vlaneseq
    %v2146 = vshrl.u32 %v2145, 7
    %v2147 = vsub.s32 6, %v2146
    %v2148 = vrot.slane %v36, %v2147
    %v2150 = vrot.slane %v36, 4
    %v2152 = vsel %vm110, %v2144, 0
    %v2154 = vsel %vm110, %v2150, 0
    %2156 = vmatprep.subr.mxu0 0.0
    %2157 = vmatpush1.xpose.msra.mxu0 0.0
    %2158 = vmatprep.subr.mxu0 0.0
    %2159 = vmatpush1.xpose.msra.mxu0 0.0
    %2160 = vmatprep.subr.mxu0 0.0
    %2161 = vmatpush1.xpose.msra.mxu0 0.0
    %2162 = vmatprep.subr.mxu0 0.0
    %2163 = vmatpush1.xpose.msra.mxu0 0.0
    %2164 = vmatprep.subr.mxu0 0.0
    %2165 = vmatpush1.xpose.msra.mxu0 0.0
    %2166 = vmatprep.subr.mxu0 0.0
    %2167 = vmatpush1.xpose.msra.mxu0 0.0
    %2168 = vmatprep.subr.mxu0 0.0
    %2169 = vmatpush1.xpose.msra.mxu0 0.0
    %2170 = vmatprep.subr.mxu0 0.0
    %2171 = vmatpush1.xpose.msra.mxu0 0.0
    %2172 = vmatprep.subr.mxu0 0.0
    %2173 = vmatpush1.xpose.msra.mxu0 0.0
    %2174 = vmatprep.subr.mxu0 0.0
    %2175 = vmatpush1.xpose.msra.mxu0 0.0
    %2176 = vmatprep.subr.mxu0 0.0
    %2177 = vmatpush1.xpose.msra.mxu0 0.0
    %2178 = vmatprep.subr.mxu0 0.0
    %2179 = vmatpush1.xpose.msra.mxu0 0.0
    %2180 = vmatprep.subr.mxu0 0.0
    %2181 = vmatpush1.xpose.msra.mxu0 0.0
    %2182 = vmatprep.subr.mxu0 0.0
    %2183 = vmatpush1.xpose.msra.mxu0 0.0
    %2184 = vmatprep.subr.mxu0 0.0
    %2185 = vmatpush1.xpose.msra.mxu0 0.0
    %2186 = vmatprep.subr.mxu0 0.0
    %2187 = vmatpush1.xpose.msra.mxu0 %v2154
    %2188 = vmatprep.subr.mxu0 0.0
    %2189 = vmatpush2.xpose.msra.mxu0 0.0
    %2190 = vmatprep.subr.mxu0 0.0
    %2191 = vmatpush2.xpose.msra.mxu0 0.0
    %2192 = vmatprep.subr.mxu0 0.0
    %2193 = vmatpush2.xpose.msra.mxu0 0.0
    %2194 = vmatprep.subr.mxu0 0.0
    %2195 = vmatpush2.xpose.msra.mxu0 0.0
    %2196 = vmatprep.subr.mxu0 0.0
    %2197 = vmatpush2.xpose.msra.mxu0 0.0
    %2198 = vmatprep.subr.mxu0 0.0
    %2199 = vmatpush2.xpose.msra.mxu0 0.0
    %2200 = vmatprep.subr.mxu0 0.0
    %2201 = vmatpush2.xpose.msra.mxu0 0.0
    %2202 = vmatprep.subr.mxu0 0.0
    %2203 = vmatpush2.xpose.msra.mxu0 0.0
    %2204 = vmatprep.subr.mxu0 0.0
    %2205 = vmatpush2.xpose.msra.mxu0 0.0
    %2206 = vmatprep.subr.mxu0 0.0
    %2207 = vmatpush2.xpose.msra.mxu0 0.0
    %2208 = vmatprep.subr.mxu0 0.0
    %2209 = vmatpush2.xpose.msra.mxu0 0.0
    %2210 = vmatprep.subr.mxu0 0.0
    %2211 = vmatpush2.xpose.msra.mxu0 0.0
    %2212 = vmatprep.subr.mxu0 0.0
    %2213 = vmatpush2.xpose.msra.mxu0 0.0
    %2214 = vmatprep.subr.mxu0 0.0
    %2215 = vmatpush2.xpose.msra.mxu0 0.0
    %2216 = vmatprep.subr.mxu0 0.0
    %2217 = vmatpush2.xpose.msra.mxu0 0.0
    %2218 = vmatprep.subr.mxu0 0.0
    %2219 = vmatpush2.xpose.msra.mxu0 0.0
    %2220 = vmatprep.mubr.f32.mxu0 0.0
    %2221 = vmatmul.mubr.f32.gmra.mxu0 %v2152
    %v2222 = vpop.f32.mrf.mxu0
    %v2223 = vadd.f32 %v2148, %v2222
    %v2224 = vpop.f32.mrf.mxu0
    %2225 = vdwg.mxu0
    %vm2226 = vcmask 9216
    %2227 = vst.msk [vmem:[#allocation5] sm:$0x3] %vm2226, %v2223
    // Predicated region
    $region26: #{cross_attention_center_estimator.1} parent=1 // pred_check
      _
    $region27: #{cross_attention_center_estimator.1} parent=1 // pred_check_branch
      %2229 = sbr.rel (0) target = $region29
    $region28: #{cross_attention_center_estimator.1} parent=1 // pred_region
      %s2231 = ssub.s32 32, 32
      %2232 = vsyncadd [#allocation4], %s2231
      %s2234 = sshll.u32 [#allocation5], 4
      %s2235 = int_to_ptr.vmem [resolvable:$true] %s2234
      %2237 = dma.vmem_to_hbm [thread:$0]  %s2235, 32, %s5, [#allocation4]
    $region29: #{cross_attention_center_estimator.1} parent=1 // pred_fallthru
      _
    // Predicated region
    $region30: #{cross_attention_center_estimator.1} parent=1 // pred_check
      _
    $region31: #{cross_attention_center_estimator.1} parent=1 // pred_check_branch
      %2239 = sbr.rel (0) target = $region33
    $region32: #{cross_attention_center_estimator.1} parent=1 // pred_region
      %2240 = dma.done [#allocation4], 32
    $region33: #{cross_attention_center_estimator.1} parent=1 // pred_fallthru
      _
    %2241 = vsyncpa [#allocation3], 1
    %2242 = vsyncpa [#allocation4], 1

</llo_original>
